<compile_context>
chip_gen: v5e
topology: v5e:2x2
jax: 0.10.0
libtpu: 0.0.40
codegen_flags: <defaults>
</compile_context>

<pallas_src>
import functools

import numpy as np
import jax
import jax.numpy as jnp
from jax.experimental import pallas as pl
from jax.experimental.pallas import tpu as pltpu

_VMEM_LIMIT = 48 * 1024 * 1024   # < v7x 64 MiB physical; plenty on v5e/v6e.


def _round_up(x, m):
    return (x + m - 1) // m * m


def _best_tile(dim, unit, cap):
    """Multiple of `unit` <= cap minimizing padding of `dim` (ties -> larger)."""
    best_t, best_w = unit, None
    for t in range(unit, cap + 1, unit):
        w = _round_up(dim, t) - dim
        if best_w is None or w <= best_w:
            best_t, best_w = t, w
    return best_t


# ----------------------------------------------------------------------------
# Fused matmul kernel:  out = relu?( A@B + bias (+ residual) )
#   A (M,K) bf16, B (K,N) bf16, f32 accumulation in VMEM scratch,
#   grid = (M/tm, N/tn, K/tk), K axis is the reduction ("arbitrary").
# ----------------------------------------------------------------------------

def _mm_kernel(a_ref, b_ref, bias_ref, o_ref, acc_ref, *, relu):
    k = pl.program_id(2)
    prod = jnp.dot(a_ref[...], b_ref[...], preferred_element_type=jnp.float32)

    @pl.when(k == 0)
    def _():
        acc_ref[...] = prod          # init-by-store: no zero-fill round trip

    @pl.when(k > 0)
    def _():
        acc_ref[...] += prod

    @pl.when(k == pl.num_programs(2) - 1)
    def _():
        y = acc_ref[...] + bias_ref[...]
        if relu:
            y = jnp.maximum(y, 0.0)
        o_ref[...] = y.astype(o_ref.dtype)


def _mm_res_kernel(a_ref, b_ref, bias_ref, res_ref, o_ref, acc_ref, *, relu):
    k = pl.program_id(2)
    prod = jnp.dot(a_ref[...], b_ref[...], preferred_element_type=jnp.float32)

    @pl.when(k == 0)
    def _():
        acc_ref[...] = prod

    @pl.when(k > 0)
    def _():
        acc_ref[...] += prod

    @pl.when(k == pl.num_programs(2) - 1)
    def _():
        y = acc_ref[...] + bias_ref[...] + res_ref[...].astype(jnp.float32)
        if relu:
            y = jnp.maximum(y, 0.0)
        o_ref[...] = y.astype(o_ref.dtype)


def matmul_fused(a, b, bias, residual=None, relu=False,
                 out_dtype=jnp.bfloat16):
    """(M,K)@(K,N) + bias[N] (+ residual[M,N]) with optional fused ReLU."""
    M, K = a.shape
    K2, N = b.shape
    assert K == K2, (K, K2)

    Mr, Nr, Kr = _round_up(M, 16), _round_up(N, 128), _round_up(K, 128)
    tm = Mr if Mr <= 512 else _best_tile(M, 256, 512)
    tn = Nr if Nr <= 512 else _best_tile(N, 256, 512)
    tk = Kr if Kr <= 1024 else _best_tile(K, 128, 1024)
    Mp, Np, Kp = _round_up(M, tm), _round_up(N, tn), _round_up(K, tk)

    # Weights/bias are pre-padded & pre-cast at parameter build time, so these
    # pads/casts are no-ops for every layer except the 7x7 stem.
    a_p = jnp.pad(a.astype(jnp.bfloat16), ((0, Mp - M), (0, Kp - K)))
    b_p = jnp.pad(b.astype(jnp.bfloat16), ((0, Kp - K), (0, Np - N)))
    bias_p = jnp.pad(bias.reshape(1, -1).astype(jnp.float32),
                     ((0, 0), (0, Np - N)))

    in_specs = [
        pl.BlockSpec((tm, tk), lambda i, j, k: (i, k)),
        pl.BlockSpec((tk, tn), lambda i, j, k: (k, j)),
        pl.BlockSpec((1, tn), lambda i, j, k: (0, j)),
    ]
    args = [a_p, b_p, bias_p]
    res_bytes = 0
    if residual is not None:
        res_p = jnp.pad(residual.astype(jnp.bfloat16),
                        ((0, Mp - M), (0, Np - N)))
        in_specs.append(pl.BlockSpec((tm, tn), lambda i, j, k: (i, j)))
        args.append(res_p)
        kernel = functools.partial(_mm_res_kernel, relu=relu)
        res_bytes = 2 * Mp * Np
    else:
        kernel = functools.partial(_mm_kernel, relu=relu)

    cost = pl.CostEstimate(
        flops=2 * Mp * Np * Kp,
        transcendentals=0,
        bytes_accessed=2 * (Mp * Kp + Kp * Np + Mp * Np) + 4 * Np + res_bytes)

    out = pl.pallas_call(
        kernel,
        out_shape=jax.ShapeDtypeStruct((Mp, Np), out_dtype),
        grid=(Mp // tm, Np // tn, Kp // tk),
        in_specs=in_specs,
        out_specs=pl.BlockSpec((tm, tn), lambda i, j, k: (i, j)),
        scratch_shapes=[pltpu.VMEM((tm, tn), jnp.float32)],
        compiler_params=pltpu.CompilerParams(
            dimension_semantics=("parallel", "parallel", "arbitrary"),
            vmem_limit_bytes=_VMEM_LIMIT),
        cost_estimate=cost,
    )(*args)
    return out[:M, :N]


# ----------------------------------------------------------------------------
# Conv (1x1, stem 7x7, stride-2 3x3) -> (im2col glue when k>1) + fused matmul
# ----------------------------------------------------------------------------

@functools.partial(jax.jit,
                   static_argnames=("kh", "kw", "stride", "padding", "relu"))
def conv2d_bn_mm(x, w, b, residual=None, *, kh, kw, stride, padding, relu):
    """x NHWC bf16 (channels already 128-padded), w (kh*kw*Cin_pad, Cout_pad)
    bf16 with BN folded, b (1, Cout_pad) f32 = BN shift.  Residual-add + ReLU
    fused into the matmul epilogue.  Output NHWC bf16 (padded channels)."""
    N, H, W, C = x.shape
    Ho = (H + 2 * padding - kh) // stride + 1
    Wo = (W + 2 * padding - kw) // stride + 1
    if kh == 1 and kw == 1 and padding == 0:
        xs = x if stride == 1 else x[:, ::stride, ::stride, :]
        patches = xs.reshape(N * Ho * Wo, C)
    else:
        # TODO(synk): only the 7x7 stem and the three stride-2 3x3 convs still
        # take this HBM im2col path; all stride-1 3x3 convs use the direct
        # Pallas kernel below.
        xp = jnp.pad(x, ((0, 0), (padding, padding), (padding, padding),
                         (0, 0)))
        cols = []
        for i in range(kh):
            for j in range(kw):
                cols.append(jax.lax.slice(
                    xp, (0, i, j, 0),
                    (N, i + (Ho - 1) * stride + 1,
                     j + (Wo - 1) * stride + 1, C),
                    (1, stride, stride, 1)))
        patches = jnp.stack(cols, axis=3).reshape(N * Ho * Wo, kh * kw * C)
    res2d = None if residual is None else residual.reshape(N * Ho * Wo, -1)
    out = matmul_fused(patches, w, b, residual=res2d, relu=relu)
    return out.reshape(N, Ho, Wo, -1)


# ----------------------------------------------------------------------------
# Direct (no-im2col) stride-1 3x3 conv + folded BN + ReLU.
# Grid = (batch, Cout-blocks, Cin-blocks); the 9 taps are accumulated in-kernel
# into an f32 VMEM scratch from shifted windows of the zero-padded activation.
# ----------------------------------------------------------------------------

def _conv3_kernel(x_ref, w_ref, b_ref, o_ref, acc_ref, *, hh, we):
    kc = pl.program_id(2)
    tc = x_ref.shape[3]

    @pl.when(kc == 0)
    def _():
        acc_ref[...] = jnp.zeros_like(acc_ref)

    for t in range(9):
        i, j = t // 3, t % 3
        patch = x_ref[0, i:i + hh, j:j + we, :].reshape(hh * we, tc)
        acc_ref[...] += jnp.dot(patch, w_ref[t],
                                preferred_element_type=jnp.float32)

    @pl.when(kc == pl.num_programs(2) - 1)
    def _():
        y = jnp.maximum(acc_ref[...] + b_ref[...], 0.0)
        o_ref[0] = y.reshape(hh, we, -1).astype(o_ref.dtype)


@jax.jit
def conv3x3_s1(x, w, b):
    """3x3 / stride 1 / pad 1 conv with folded BN + ReLU.
    x NHWC bf16 (C % 128 == 0), w (9, C, Co) bf16, b (1, Co) f32."""
    N, H, W, C = x.shape
    Co = w.shape[-1]
    We = _round_up(W, 8)                       # lane/sublane-friendly width
    xp = jnp.pad(x, ((0, 0), (1, 1), (1, 1 + We - W), (0, 0)))
    Hp, Wp = H + 2, We + 2
    tc = C if C <= 256 else 256
    tn = Co if Co <= 512 else 512
    assert C % tc == 0 and Co % tn == 0

    cost = pl.CostEstimate(
        flops=2 * 9 * N * H * We * C * Co,
        transcendentals=0,
        bytes_accessed=2 * (N * Hp * Wp * C + 9 * C * Co + N * H * We * Co)
        + 4 * Co)

    out = pl.pallas_call(
        functools.partial(_conv3_kernel, hh=H, we=We),
        out_shape=jax.ShapeDtypeStruct((N, H, We, Co), jnp.bfloat16),
        grid=(N, Co // tn, C // tc),
        in_specs=[
            pl.BlockSpec((1, Hp, Wp, tc), lambda n, co, c: (n, 0, 0, c)),
            pl.BlockSpec((9, tc, tn), lambda n, co, c: (0, c, co)),
            pl.BlockSpec((1, tn), lambda n, co, c: (0, co)),
        ],
        out_specs=pl.BlockSpec((1, H, We, tn), lambda n, co, c: (n, 0, 0, co)),
        scratch_shapes=[pltpu.VMEM((H * We, tn), jnp.float32)],
        compiler_params=pltpu.CompilerParams(
            dimension_semantics=("parallel", "parallel", "arbitrary"),
            vmem_limit_bytes=_VMEM_LIMIT),
        cost_estimate=cost,
    )(xp, w, b)
    if We != W:
        out = out[:, :, :W, :]
    return out


# ----------------------------------------------------------------------------
# MaxPool 3x3 s2 p1 -- fused XLA max-chain (no 9x HBM materialization), then
# global average pool + fused classification head as Pallas kernels.
# ----------------------------------------------------------------------------

@jax.jit
def maxpool_3x3_s2_p1(x):
    N, H, W, C = x.shape
    Ho = (H + 2 - 3) // 2 + 1
    Wo = (W + 2 - 3) // 2 + 1
    xp = jnp.pad(x, ((0, 0), (1, 1), (1, 1), (0, 0)),
                 constant_values=-jnp.inf)
    out = None
    for i in range(3):
        for j in range(3):
            v = jax.lax.slice(
                xp, (0, i, j, 0),
                (N, i + (Ho - 1) * 2 + 1, j + (Wo - 1) * 2 + 1, C),
                (1, 2, 2, 1))
            out = v if out is None else jnp.maximum(out, v)
    return out


def _avgpool_kernel(x_ref, o_ref):
    o_ref[...] = jnp.mean(x_ref[...].astype(jnp.float32), axis=1)


@jax.jit
def global_avgpool(x):
    """AdaptiveAvgPool2d((1,1)) + flatten: NHWC -> (N, C) f32."""
    N, H, W, C = x.shape
    x3 = x.reshape(N, H * W, C)
    tc = C if C <= 512 else 512
    assert C % tc == 0
    return pl.pallas_call(
        _avgpool_kernel,
        out_shape=jax.ShapeDtypeStruct((N, C), jnp.float32),
        grid=(C // tc,),
        in_specs=[pl.BlockSpec((N, H * W, tc), lambda j: (0, 0, j))],
        out_specs=pl.BlockSpec((N, tc), lambda j: (0, j)),
        compiler_params=pltpu.CompilerParams(
            dimension_semantics=("parallel",),
            vmem_limit_bytes=_VMEM_LIMIT),
    )(x3)


def _head_kernel(x_ref, fcw_ref, fcb_ref, l1w_ref, l1b_ref, l2w_ref, l2b_ref,
                 o_ref, *, n_valid):
    # resnet.fc -> l1 -> ReLU -> l2 -> log_softmax, all in one kernel
    h = jnp.dot(x_ref[...], fcw_ref[...],
                preferred_element_type=jnp.float32) + fcb_ref[...]
    h = jnp.dot(h.astype(jnp.bfloat16), l1w_ref[...],
                preferred_element_type=jnp.float32) + l1b_ref[...]
    h = jnp.maximum(h, 0.0)
    z = jnp.dot(h.astype(jnp.bfloat16), l2w_ref[...],
                preferred_element_type=jnp.float32) + l2b_ref[...]
    col = jax.lax.broadcasted_iota(jnp.int32, z.shape, 1)
    valid = col < n_valid
    zm = jnp.where(valid, z, -1e30)
    m = jnp.max(zm, axis=1, keepdims=True)
    e = jnp.where(valid, jnp.exp(zm - m), 0.0)
    lse = m + jnp.log(jnp.sum(e, axis=1, keepdims=True))
    o_ref[...] = z - lse


@functools.partial(jax.jit, static_argnames=("n_classes",))
def head(x, fc_w, fc_b, l1_w, l1_b, l2_w, l2_b, *, n_classes):
    B, D = x.shape
    bm = 8
    Bp = _round_up(B, bm)
    xp = jnp.pad(x, ((0, Bp - B), (0, 0))).astype(jnp.bfloat16)
    N1, N2, N3 = fc_w.shape[1], l1_w.shape[1], l2_w.shape[1]
    out = pl.pallas_call(
        functools.partial(_head_kernel, n_valid=n_classes),
        out_shape=jax.ShapeDtypeStruct((Bp, N3), jnp.float32),
        grid=(Bp // bm,),
        in_specs=[
            pl.BlockSpec((bm, D), lambda i: (i, 0)),
            pl.BlockSpec((D, N1), lambda i: (0, 0)),
            pl.BlockSpec((1, N1), lambda i: (0, 0)),
            pl.BlockSpec((N1, N2), lambda i: (0, 0)),
            pl.BlockSpec((1, N2), lambda i: (0, 0)),
            pl.BlockSpec((N2, N3), lambda i: (0, 0)),
            pl.BlockSpec((1, N3), lambda i: (0, 0)),
        ],
        out_specs=pl.BlockSpec((bm, N3), lambda i: (i, 0)),
        compiler_params=pltpu.CompilerParams(
            dimension_semantics=("parallel",),
            vmem_limit_bytes=_VMEM_LIMIT),
    )(xp, fc_w, fc_b, l1_w, l1_b, l2_w, l2_b)
    return out[:B, :n_classes]


# ----------------------------------------------------------------------------
# Deterministic synthetic parameters, BN folded / padded / bf16-cast at build
# time (inference semantics, no checkpoint load).
# ----------------------------------------------------------------------------

class ParamGen:
    def __init__(self, key):
        self._key = key
        self._n = 0

    def _next(self):
        self._n += 1
        return jax.random.fold_in(self._key, self._n)

    def conv(self, kh, kw, cin, cout):
        std = 1.0 / np.sqrt(kh * kw * cin)
        return std * jax.random.normal(self._next(), (kh, kw, cin, cout),
                                       jnp.float32)

    def bn(self, c):
        k1, k2, k3, k4 = jax.random.split(self._next(), 4)
        gamma = 0.5 + 0.05 * jax.random.normal(k1, (c,), jnp.float32)
        beta = 0.02 * jax.random.normal(k2, (c,), jnp.float32)
        mean = 0.02 * jax.random.normal(k3, (c,), jnp.float32)
        var = 1.0 + 0.05 * jnp.abs(jax.random.normal(k4, (c,), jnp.float32))
        eps = 1e-5
        scale = gamma / jnp.sqrt(var + eps)
        shift = beta - mean * scale
        return (scale, shift)

    def linear(self, cin, cout):
        std = 1.0 / np.sqrt(cin)
        w = std * jax.random.normal(self._next(), (cin, cout), jnp.float32)
        b = 0.01 * jax.random.normal(self._next(), (cout,), jnp.float32)
        return w, b


def prep_conv_mm(w, bn, cin_pad):
    """Fold BN into w, pad channels, reshape to (kh*kw*cin_pad, cout_pad) bf16."""
    kh, kw, cin, cout = w.shape
    scale, shift = bn
    npad = _round_up(cout, 128)
    wf = jnp.pad(w * scale, ((0, 0), (0, 0), (0, cin_pad - cin),
                             (0, npad - cout)))
    wf = wf.reshape(kh * kw * cin_pad, npad).astype(jnp.bfloat16)
    bias = jnp.pad(shift, (0, npad - cout)).astype(jnp.float32).reshape(1, npad)
    return {"w": wf, "b": bias, "kh": kh, "kw": kw}


def prep_conv3x3(w, bn, cin_pad):
    """Fold BN into w, pad channels, reshape to (9, cin_pad, cout_pad) bf16."""
    kh, kw, cin, cout = w.shape
    scale, shift = bn
    npad = _round_up(cout, 128)
    wf = jnp.pad(w * scale, ((0, 0), (0, 0), (0, cin_pad - cin),
                             (0, npad - cout)))
    wf = wf.reshape(9, cin_pad, npad).astype(jnp.bfloat16)
    bias = jnp.pad(shift, (0, npad - cout)).astype(jnp.float32).reshape(1, npad)
    return {"w": wf, "b": bias}


def make_params(key, n_classes=6):
    pg = ParamGen(key)
    params = {"n_classes": n_classes}
    params["conv1"] = prep_conv_mm(pg.conv(7, 7, 3, 64), pg.bn(64), cin_pad=3)
    # ResNet-152: bottleneck counts [3, 8, 36, 3], expansion 4
    cfg = [(64, 3), (128, 8), (256, 36), (512, 3)]
    in_c = 64
    layers = []
    for li, (planes, nblocks) in enumerate(cfg):
        blocks = []
        for b in range(nblocks):
            s = 2 if (li > 0 and b == 0) else 1
            in_pad = _round_up(in_c, 128)
            mid_pad = _round_up(planes, 128)
            blk = {
                "conv1": prep_conv_mm(pg.conv(1, 1, in_c, planes),
                                      pg.bn(planes), cin_pad=in_pad),
            }
            if s == 1:
                blk["conv2"] = prep_conv3x3(pg.conv(3, 3, planes, planes),
                                            pg.bn(planes), cin_pad=mid_pad)
            else:
                blk["conv2"] = prep_conv_mm(pg.conv(3, 3, planes, planes),
                                            pg.bn(planes), cin_pad=mid_pad)
            blk["conv3"] = prep_conv_mm(pg.conv(1, 1, planes, planes * 4),
                                        pg.bn(planes * 4), cin_pad=mid_pad)
            if b == 0 and (s != 1 or in_c != planes * 4):
                blk["down"] = prep_conv_mm(pg.conv(1, 1, in_c, planes * 4),
                                           pg.bn(planes * 4), cin_pad=in_pad)
            blocks.append(blk)
            in_c = planes * 4
        layers.append(blocks)
    params["layers"] = layers
    # head: resnet.fc (2048->1000), l1 (1000->1024), l2 (1024->n_classes)
    fc_w, fc_b = pg.linear(512 * 4, 1000)
    l1_w, l1_b = pg.linear(1000, 1024)
    l2_w, l2_b = pg.linear(1024, n_classes)
    N1 = _round_up(1000, 128)
    N3 = _round_up(n_classes, 128)
    params["fc_w"] = jnp.pad(fc_w, ((0, 0), (0, N1 - 1000))).astype(jnp.bfloat16)
    params["fc_b"] = jnp.pad(fc_b, (0, N1 - 1000)).astype(jnp.float32).reshape(1, N1)
    params["l1_w"] = jnp.pad(l1_w, ((0, N1 - 1000), (0, 0))).astype(jnp.bfloat16)
    params["l1_b"] = l1_b.astype(jnp.float32).reshape(1, 1024)
    params["l2_w"] = jnp.pad(l2_w, ((0, 0), (0, N3 - n_classes))).astype(jnp.bfloat16)
    params["l2_b"] = jnp.pad(l2_b, (0, N3 - n_classes)).astype(jnp.float32).reshape(1, N3)
    return params


# ----------------------------------------------------------------------------
# Forward = pretrained_resnet152.forward (inference)
# ----------------------------------------------------------------------------

def bottleneck(x, blk, stride):
    c1 = blk["conv1"]
    out = conv2d_bn_mm(x, c1["w"], c1["b"],
                       kh=1, kw=1, stride=1, padding=0, relu=True)
    if stride == 1:
        out = conv3x3_s1(out, blk["conv2"]["w"], blk["conv2"]["b"])
    else:
        c2 = blk["conv2"]
        out = conv2d_bn_mm(out, c2["w"], c2["b"],
                           kh=3, kw=3, stride=stride, padding=1, relu=True)
    if "down" in blk:
        d = blk["down"]
        identity = conv2d_bn_mm(x, d["w"], d["b"],
                                kh=1, kw=1, stride=stride, padding=0,
                                relu=False)
    else:
        identity = x
    # conv3 + bn3 + residual-add + ReLU fused in one matmul epilogue
    c3 = blk["conv3"]
    out = conv2d_bn_mm(out, c3["w"], c3["b"], identity,
                       kh=1, kw=1, stride=1, padding=0, relu=True)
    return out


def forward(params, x_nchw):
    x = jnp.transpose(x_nchw, (0, 2, 3, 1)).astype(jnp.bfloat16)  # NCHW->NHWC
    # --- ResNet-152 backbone ---
    x = conv2d_bn_mm(x, params["conv1"]["w"], params["conv1"]["b"],
                     kh=7, kw=7, stride=2, padding=3, relu=True)
    x = maxpool_3x3_s2_p1(x)
    for li, blocks in enumerate(params["layers"]):
        for bi, blk in enumerate(blocks):
            stride = 2 if (li > 0 and bi == 0) else 1
            x = bottleneck(x, blk, stride)
    feat = global_avgpool(x)                                   # (N, 2048) f32
    # --- head: fc->1000, view, l1 -> relu -> l2 -> log_softmax (one kernel) ---
    # nn.Dropout(0.4) is declared in __init__ but never applied in forward()
    return head(feat, params["fc_w"], params["fc_b"],
                params["l1_w"], params["l1_b"],
                params["l2_w"], params["l2_b"],
                n_classes=params["n_classes"])


if __name__ == "__main__":
    key = jax.random.PRNGKey(0)
    pkey, xkey = jax.random.split(key)
    params = make_params(pkey, n_classes=6)
    # Small input consistent with the module: NCHW image batch.
    x = jax.random.normal(xkey, (2, 3, 32, 32), jnp.float32)
    out = forward(params, x)
    out = jax.block_until_ready(out)
    assert out.shape == (2, 6), out.shape
    assert bool(jnp.all(jnp.isfinite(out)))
    # log-softmax rows must exponentiate-sum to 1
    row_sums = jnp.sum(jnp.exp(out), axis=1)
    assert bool(jnp.all(jnp.abs(row_sums - 1.0) < 1e-3))
    print("KERNEL_OK")
</pallas_src>

<mosaic_0001>
module attributes {stable_mosaic.version = 11 : i64} {
  func.func @_mm_kernel(%arg0: i32, %arg1: i32, %arg2: i32, %arg3: memref<512x256xbf16, #tpu.memory_space<vmem>>, %arg4: memref<256x128xbf16, #tpu.memory_space<vmem>>, %arg5: memref<1x128xf32, #tpu.memory_space<vmem>>, %arg6: memref<512x128xbf16, #tpu.memory_space<vmem>>, %arg7: memref<512x128xf32, #tpu.memory_space<vmem>>) attributes {dimension_semantics = [#tpu.dimension_semantics<parallel>, #tpu.dimension_semantics<parallel>, #tpu.dimension_semantics<arbitrary>], iteration_bounds = array<i64: 1, 1, 1>, scalar_prefetch = 0 : i64, scratch_operands = 1 : i64, tpu.core_type = #tpu.core_type<tc>, window_params = [{transform_indices = @transform_0, window_bounds = array<i64: 512, 256>}, {transform_indices = @transform_1, window_bounds = array<i64: 256, 128>}, {transform_indices = @transform_2, window_bounds = array<i64: 1, 128>}, {transform_indices = @transform_3, window_bounds = array<i64: 512, 128>}]} {
    %c0 = arith.constant 0 : index
    %c0_0 = arith.constant 0 : index
    %0 = vector.load %arg3[%c0, %c0_0] : memref<512x256xbf16, #tpu.memory_space<vmem>>, vector<512x256xbf16>
    %c0_1 = arith.constant 0 : index
    %c0_2 = arith.constant 0 : index
    %1 = vector.load %arg4[%c0_1, %c0_2] : memref<256x128xbf16, #tpu.memory_space<vmem>>, vector<256x128xbf16>
    %cst = arith.constant dense<0.000000e+00> : vector<512x128xf32>
    %2 = tpu.matmul %0, %1, %cst {dimension_numbers = #tpu.dot_dimension_numbers<[1], [0], [0], [1], [0, 0, 1, 1], [], []>} : vector<512x256xbf16>, vector<256x128xbf16>, vector<512x128xf32> -> vector<512x128xf32>
    %c0_i32 = arith.constant 0 : i32
    %3 = arith.cmpi eq, %arg2, %c0_i32 : i32
    %4 = arith.extui %3 : i1 to i32
    %c0_i32_3 = arith.constant 0 : i32
    %5 = arith.cmpi ne, %4, %c0_i32_3 : i32
    scf.if %5 {
      %c0_8 = arith.constant 0 : index
      %c0_9 = arith.constant 0 : index
      %12 = vector.load %arg7[%c0_8, %c0_9] : memref<512x128xf32, #tpu.memory_space<vmem>>, vector<512x128xf32>
      tpu.vector_store %arg7[%c0_8, %c0_9], %2 {strides = array<i32>} : memref<512x128xf32, #tpu.memory_space<vmem>>, vector<512x128xf32>,
    } else {
    }
    %c0_i32_4 = arith.constant 0 : i32
    %6 = arith.cmpi sgt, %arg2, %c0_i32_4 : i32
    %7 = arith.extui %6 : i1 to i32
    %c0_i32_5 = arith.constant 0 : i32
    %8 = arith.cmpi ne, %7, %c0_i32_5 : i32
    scf.if %8 {
      %c0_8 = arith.constant 0 : index
      %c0_9 = arith.constant 0 : index
      %12 = vector.load %arg7[%c0_8, %c0_9] : memref<512x128xf32, #tpu.memory_space<vmem>>, vector<512x128xf32>
      %13 = arith.addf %12, %2 : vector<512x128xf32>
      %c0_10 = arith.constant 0 : index
      %c0_11 = arith.constant 0 : index
      %14 = vector.load %arg7[%c0_10, %c0_11] : memref<512x128xf32, #tpu.memory_space<vmem>>, vector<512x128xf32>
      tpu.vector_store %arg7[%c0_10, %c0_11], %13 {strides = array<i32>} : memref<512x128xf32, #tpu.memory_space<vmem>>, vector<512x128xf32>,
    } else {
    }
    %c0_i32_6 = arith.constant 0 : i32
    %9 = arith.cmpi eq, %arg2, %c0_i32_6 : i32
    %10 = arith.extui %9 : i1 to i32
    %c0_i32_7 = arith.constant 0 : i32
    %11 = arith.cmpi ne, %10, %c0_i32_7 : i32
    scf.if %11 {
      %c0_8 = arith.constant 0 : index
      %c0_9 = arith.constant 0 : index
      %12 = vector.load %arg7[%c0_8, %c0_9] : memref<512x128xf32, #tpu.memory_space<vmem>>, vector<512x128xf32>
      %c0_10 = arith.constant 0 : index
      %c0_11 = arith.constant 0 : index
      %13 = vector.load %arg5[%c0_10, %c0_11] : memref<1x128xf32, #tpu.memory_space<vmem>>, vector<1x128xf32>
      %14 = vector.broadcast %13 : vector<1x128xf32> to vector<512x128xf32>
      %15 = arith.addf %12, %14 : vector<512x128xf32>
      %cst_12 = arith.constant 0.000000e+00 : f32
      %16 = vector.broadcast %cst_12 : f32 to vector<512x128xf32>
      %17 = arith.maximumf %15, %16 : vector<512x128xf32>
      %18 = arith.truncf %17 : vector<512x128xf32> to vector<512x128xbf16>
      %c0_13 = arith.constant 0 : index
      %c0_14 = arith.constant 0 : index
      %19 = vector.load %arg6[%c0_13, %c0_14] : memref<512x128xbf16, #tpu.memory_space<vmem>>, vector<512x128xbf16>
      tpu.vector_store %arg6[%c0_13, %c0_14], %18 {strides = array<i32>} : memref<512x128xbf16, #tpu.memory_space<vmem>>, vector<512x128xbf16>,
    } else {
    }
    return
  }
  func.func @transform_0(%arg0: i32, %arg1: i32, %arg2: i32) -> (i32, i32) {
    %c0_i32 = arith.constant 0 : i32
    return %arg0, %arg2 : i32, i32
  }
  func.func @transform_1(%arg0: i32, %arg1: i32, %arg2: i32) -> (i32, i32) {
    %c0_i32 = arith.constant 0 : i32
    return %arg2, %arg1 : i32, i32
  }
  func.func @transform_2(%arg0: i32, %arg1: i32, %arg2: i32) -> (i32, i32) {
    %c0_i32 = arith.constant 0 : i32
    %c0_i32_0 = arith.constant 0 : i32
    return %c0_i32, %arg1 : i32, i32
  }
  func.func @transform_3(%arg0: i32, %arg1: i32, %arg2: i32) -> (i32, i32) {
    %c0_i32 = arith.constant 0 : i32
    return %arg0, %arg1 : i32, i32
  }
}

</mosaic_0001>

<llo_original>
// kernel: conv2d_bn_mm.1
$region0: #{conv2d_bn_mm.1}
  #allocation0 [shape = 'u32[]', space=smem, size = 0x4, offset = 0x4, fixed_abs, tag = 'smem constant byte address 0x4 - core index']
  #allocation1 [shape = 'u32[72,128]{1,0:T(1,128)}', space=vmem, size = 0x9000, scoped, tag = 'internal scratch']
  #allocation2 [shape = 'f32[512,128]{1,0:T(8,128)}', space=vmem, size = 0x40000, scoped, tag = 'scratch operand']
  %s0 = inlined_call_operand.vmem [shape: bf16[512,256], index: 0, kind: input, shape index: {}]
  %s1 = inlined_call_operand.vmem [shape: bf16[256,128], index: 1, kind: input, shape index: {}]
  %s2 = inlined_call_operand.vmem [shape: f32[1,128], index: 2, kind: input, shape index: {}]
  %s3 = inlined_call_operand.hbm [shape: bf16[512,128], index: 3, kind: output, shape index: {}]
  %s4 = sld [smem:[#allocation0]]
  $region34: #{conv2d_bn_mm.1} parent=0
    _
  %s6 = ssub.s32 1, %s4
  %s7 = scalar_select 0, %s6, %s4
  $region1: #{conv2d_bn_mm.1} parent=0
    #allocation3 [shape = 'u8[131072]{0}', space=vmem, size = 0x20000, scoped, tag = 'output window, operand 0, single buffered']
    #allocation4 [shape = 's32[1]{0}', space=sflag, size = 0x4, scoped, tag = 'scoped memory for conv2d_bn_mm.1']
    %8 = vsyncpa [#allocation4], 0
    // Predicated region
    $region2: #{conv2d_bn_mm.1} parent=1 // pred_check
      _
    $region3: #{conv2d_bn_mm.1} parent=1 // pred_check_branch
      %10 = sbr.rel (0) target = $region5
    $region4: #{conv2d_bn_mm.1} parent=1 // pred_region
      _
    $region5: #{conv2d_bn_mm.1} parent=1 // pred_fallthru
      _
    // Predicated region
    $region6: #{conv2d_bn_mm.1} parent=1 // pred_check
      _
    $region7: #{conv2d_bn_mm.1} parent=1 // pred_check_branch
      %12 = sbr.rel (0) target = $region9
    $region8: #{conv2d_bn_mm.1} parent=1 // pred_region
      _
    $region9: #{conv2d_bn_mm.1} parent=1 // pred_fallthru
      _
    // Predicated region
    $region10: #{conv2d_bn_mm.1} parent=1 // pred_check
      _
    $region11: #{conv2d_bn_mm.1} parent=1 // pred_check_branch
      %14 = sbr.rel (0) target = $region13
    $region12: #{conv2d_bn_mm.1} parent=1 // pred_region
      _
    $region13: #{conv2d_bn_mm.1} parent=1 // pred_fallthru
      _
    %v15 = vld [vmem:[%s0] sm:$0xff]
    %v16 = vld [vmem:[%s0 + $0x8] sm:$0xff]
    %v17 = vld [vmem:[%s0 + $0x10] sm:$0xff]
    %v18 = vld [vmem:[%s0 + $0x18] sm:$0xff]
    %v19 = vld [vmem:[%s0 + $0x20] sm:$0xff]
    %v20 = vld [vmem:[%s0 + $0x28] sm:$0xff]
    %v21 = vld [vmem:[%s0 + $0x30] sm:$0xff]
    %v22 = vld [vmem:[%s0 + $0x38] sm:$0xff]
    %v23 = vld [vmem:[%s0 + $0x40] sm:$0xff]
    %v24 = vld [vmem:[%s0 + $0x48] sm:$0xff]
    %v25 = vld [vmem:[%s0 + $0x50] sm:$0xff]
    %v26 = vld [vmem:[%s0 + $0x58] sm:$0xff]
    %v27 = vld [vmem:[%s0 + $0x60] sm:$0xff]
    %v28 = vld [vmem:[%s0 + $0x68] sm:$0xff]
    %v29 = vld [vmem:[%s0 + $0x70] sm:$0xff]
    %v30 = vld [vmem:[%s0 + $0x78] sm:$0xff]
    %v31 = vld [vmem:[%s0 + $0x80] sm:$0xff]
    %v32 = vld [vmem:[%s0 + $0x88] sm:$0xff]
    %v33 = vld [vmem:[%s0 + $0x90] sm:$0xff]
    %v34 = vld [vmem:[%s0 + $0x98] sm:$0xff]
    %v35 = vld [vmem:[%s0 + $0xa0] sm:$0xff]
    %v36 = vld [vmem:[%s0 + $0xa8] sm:$0xff]
    %v37 = vld [vmem:[%s0 + $0xb0] sm:$0xff]
    %v38 = vld [vmem:[%s0 + $0xb8] sm:$0xff]
    %v39 = vld [vmem:[%s0 + $0xc0] sm:$0xff]
    %v40 = vld [vmem:[%s0 + $0xc8] sm:$0xff]
    %v41 = vld [vmem:[%s0 + $0xd0] sm:$0xff]
    %v42 = vld [vmem:[%s0 + $0xd8] sm:$0xff]
    %v43 = vld [vmem:[%s0 + $0xe0] sm:$0xff]
    %v44 = vld [vmem:[%s0 + $0xe8] sm:$0xff]
    %v45 = vld [vmem:[%s0 + $0xf0] sm:$0xff]
    %v46 = vld [vmem:[%s0 + $0xf8] sm:$0xff]
    %v47 = vld [vmem:[%s0 + $0x100] sm:$0xff]
    %v48 = vld [vmem:[%s0 + $0x108] sm:$0xff]
    %v49 = vld [vmem:[%s0 + $0x110] sm:$0xff]
    %v50 = vld [vmem:[%s0 + $0x118] sm:$0xff]
    %v51 = vld [vmem:[%s0 + $0x120] sm:$0xff]
    %v52 = vld [vmem:[%s0 + $0x128] sm:$0xff]
    %v53 = vld [vmem:[%s0 + $0x130] sm:$0xff]
    %v54 = vld [vmem:[%s0 + $0x138] sm:$0xff]
    %v55 = vld [vmem:[%s0 + $0x140] sm:$0xff]
    %v56 = vld [vmem:[%s0 + $0x148] sm:$0xff]
    %v57 = vld [vmem:[%s0 + $0x150] sm:$0xff]
    %v58 = vld [vmem:[%s0 + $0x158] sm:$0xff]
    %v59 = vld [vmem:[%s0 + $0x160] sm:$0xff]
    %v60 = vld [vmem:[%s0 + $0x168] sm:$0xff]
    %v61 = vld [vmem:[%s0 + $0x170] sm:$0xff]
    %v62 = vld [vmem:[%s0 + $0x178] sm:$0xff]
    %v63 = vld [vmem:[%s0 + $0x180] sm:$0xff]
    %v64 = vld [vmem:[%s0 + $0x188] sm:$0xff]
    %v65 = vld [vmem:[%s0 + $0x190] sm:$0xff]
    %v66 = vld [vmem:[%s0 + $0x198] sm:$0xff]
    %v67 = vld [vmem:[%s0 + $0x1a0] sm:$0xff]
    %v68 = vld [vmem:[%s0 + $0x1a8] sm:$0xff]
    %v69 = vld [vmem:[%s0 + $0x1b0] sm:$0xff]
    %v70 = vld [vmem:[%s0 + $0x1b8] sm:$0xff]
    %v71 = vld [vmem:[%s0 + $0x1c0] sm:$0xff]
    %v72 = vld [vmem:[%s0 + $0x1c8] sm:$0xff]
    %v73 = vld [vmem:[%s0 + $0x1d0] sm:$0xff]
    %v74 = vld [vmem:[%s0 + $0x1d8] sm:$0xff]
    %v75 = vld [vmem:[%s0 + $0x1e0] sm:$0xff]
    %v76 = vld [vmem:[%s0 + $0x1e8] sm:$0xff]
    %v77 = vld [vmem:[%s0 + $0x1f0] sm:$0xff]
    %v78 = vld [vmem:[%s0 + $0x1f8] sm:$0xff]
    %v79 = vld [vmem:[%s1] sm:$0xf]
    %v80 = vld [vmem:[%s1 + $0x4] sm:$0xf]
    %v81 = vld [vmem:[%s1 + $0x8] sm:$0xf]
    %v82 = vld [vmem:[%s1 + $0xc] sm:$0xf]
    %v83 = vld [vmem:[%s1 + $0x10] sm:$0xf]
    %v84 = vld [vmem:[%s1 + $0x14] sm:$0xf]
    %v85 = vld [vmem:[%s1 + $0x18] sm:$0xf]
    %v86 = vld [vmem:[%s1 + $0x1c] sm:$0xf]
    %v87 = vld [vmem:[%s1 + $0x20] sm:$0xf]
    %v88 = vld [vmem:[%s1 + $0x24] sm:$0xf]
    %v89 = vld [vmem:[%s1 + $0x28] sm:$0xf]
    %v90 = vld [vmem:[%s1 + $0x2c] sm:$0xf]
    %v91 = vld [vmem:[%s1 + $0x30] sm:$0xf]
    %v92 = vld [vmem:[%s1 + $0x34] sm:$0xf]
    %v93 = vld [vmem:[%s1 + $0x38] sm:$0xf]
    %v94 = vld [vmem:[%s1 + $0x3c] sm:$0xf]
    %v95 = vld [vmem:[%s1 + $0x40] sm:$0xf]
    %v96 = vld [vmem:[%s1 + $0x44] sm:$0xf]
    %v97 = vld [vmem:[%s1 + $0x48] sm:$0xf]
    %v98 = vld [vmem:[%s1 + $0x4c] sm:$0xf]
    %v99 = vld [vmem:[%s1 + $0x50] sm:$0xf]
    %v100 = vld [vmem:[%s1 + $0x54] sm:$0xf]
    %v101 = vld [vmem:[%s1 + $0x58] sm:$0xf]
    %v102 = vld [vmem:[%s1 + $0x5c] sm:$0xf]
    %v103 = vld [vmem:[%s1 + $0x60] sm:$0xf]
    %v104 = vld [vmem:[%s1 + $0x64] sm:$0xf]
    %v105 = vld [vmem:[%s1 + $0x68] sm:$0xf]
    %v106 = vld [vmem:[%s1 + $0x6c] sm:$0xf]
    %v107 = vld [vmem:[%s1 + $0x70] sm:$0xf]
    %v108 = vld [vmem:[%s1 + $0x74] sm:$0xf]
    %v109 = vld [vmem:[%s1 + $0x78] sm:$0xf]
    %v110 = vld [vmem:[%s1 + $0x7c] sm:$0xf]
    %v175 = vunpack.c.l.b16 %v15
    %v176 = vunpack.c.h.b16 %v15
    %v177 = vunpack.c.l.b16 %v16
    %v178 = vunpack.c.h.b16 %v16
    %v179 = vunpack.c.l.b16 %v17
    %v180 = vunpack.c.h.b16 %v17
    %v181 = vunpack.c.l.b16 %v18
    %v182 = vunpack.c.h.b16 %v18
    %v183 = vunpack.c.l.b16 %v19
    %v184 = vunpack.c.h.b16 %v19
    %v185 = vunpack.c.l.b16 %v20
    %v186 = vunpack.c.h.b16 %v20
    %v187 = vunpack.c.l.b16 %v21
    %v188 = vunpack.c.h.b16 %v21
    %v189 = vunpack.c.l.b16 %v22
    %v190 = vunpack.c.h.b16 %v22
    %v191 = vunpack.c.l.b16 %v23
    %v192 = vunpack.c.h.b16 %v23
    %v193 = vunpack.c.l.b16 %v24
    %v194 = vunpack.c.h.b16 %v24
    %v195 = vunpack.c.l.b16 %v25
    %v196 = vunpack.c.h.b16 %v25
    %v197 = vunpack.c.l.b16 %v26
    %v198 = vunpack.c.h.b16 %v26
    %v199 = vunpack.c.l.b16 %v27
    %v200 = vunpack.c.h.b16 %v27
    %v201 = vunpack.c.l.b16 %v28
    %v202 = vunpack.c.h.b16 %v28
    %v203 = vunpack.c.l.b16 %v29
    %v204 = vunpack.c.h.b16 %v29
    %v205 = vunpack.c.l.b16 %v30
    %v206 = vunpack.c.h.b16 %v30
    %v207 = vunpack.c.l.b16 %v31
    %v208 = vunpack.c.h.b16 %v31
    %v209 = vunpack.c.l.b16 %v32
    %v210 = vunpack.c.h.b16 %v32
    %v211 = vunpack.c.l.b16 %v33
    %v212 = vunpack.c.h.b16 %v33
    %v213 = vunpack.c.l.b16 %v34
    %v214 = vunpack.c.h.b16 %v34
    %v215 = vunpack.c.l.b16 %v35
    %v216 = vunpack.c.h.b16 %v35
    %v217 = vunpack.c.l.b16 %v36
    %v218 = vunpack.c.h.b16 %v36
    %v219 = vunpack.c.l.b16 %v37
    %v220 = vunpack.c.h.b16 %v37
    %v221 = vunpack.c.l.b16 %v38
    %v222 = vunpack.c.h.b16 %v38
    %v223 = vunpack.c.l.b16 %v39
    %v224 = vunpack.c.h.b16 %v39
    %v225 = vunpack.c.l.b16 %v40
    %v226 = vunpack.c.h.b16 %v40
    %v227 = vunpack.c.l.b16 %v41
    %v228 = vunpack.c.h.b16 %v41
    %v229 = vunpack.c.l.b16 %v42
    %v230 = vunpack.c.h.b16 %v42
    %v231 = vunpack.c.l.b16 %v43
    %v232 = vunpack.c.h.b16 %v43
    %v233 = vunpack.c.l.b16 %v44
    %v234 = vunpack.c.h.b16 %v44
    %v235 = vunpack.c.l.b16 %v45
    %v236 = vunpack.c.h.b16 %v45
    %v237 = vunpack.c.l.b16 %v46
    %v238 = vunpack.c.h.b16 %v46
    %v239 = vunpack.c.l.b16 %v47
    %v240 = vunpack.c.h.b16 %v47
    %v241 = vunpack.c.l.b16 %v48
    %v242 = vunpack.c.h.b16 %v48
    %v243 = vunpack.c.l.b16 %v49
    %v244 = vunpack.c.h.b16 %v49
    %v245 = vunpack.c.l.b16 %v50
    %v246 = vunpack.c.h.b16 %v50
    %v247 = vunpack.c.l.b16 %v51
    %v248 = vunpack.c.h.b16 %v51
    %v249 = vunpack.c.l.b16 %v52
    %v250 = vunpack.c.h.b16 %v52
    %v251 = vunpack.c.l.b16 %v53
    %v252 = vunpack.c.h.b16 %v53
    %v253 = vunpack.c.l.b16 %v54
    %v254 = vunpack.c.h.b16 %v54
    %v255 = vunpack.c.l.b16 %v55
    %v256 = vunpack.c.h.b16 %v55
    %v257 = vunpack.c.l.b16 %v56
    %v258 = vunpack.c.h.b16 %v56
    %v259 = vunpack.c.l.b16 %v57
    %v260 = vunpack.c.h.b16 %v57
    %v261 = vunpack.c.l.b16 %v58
    %v262 = vunpack.c.h.b16 %v58
    %v263 = vunpack.c.l.b16 %v59
    %v264 = vunpack.c.h.b16 %v59
    %v265 = vunpack.c.l.b16 %v60
    %v266 = vunpack.c.h.b16 %v60
    %v267 = vunpack.c.l.b16 %v61
    %v268 = vunpack.c.h.b16 %v61
    %v269 = vunpack.c.l.b16 %v62
    %v270 = vunpack.c.h.b16 %v62
    %v271 = vunpack.c.l.b16 %v63
    %v272 = vunpack.c.h.b16 %v63
    %v273 = vunpack.c.l.b16 %v64
    %v274 = vunpack.c.h.b16 %v64
    %v275 = vunpack.c.l.b16 %v65
    %v276 = vunpack.c.h.b16 %v65
    %v277 = vunpack.c.l.b16 %v66
    %v278 = vunpack.c.h.b16 %v66
    %v279 = vunpack.c.l.b16 %v67
    %v280 = vunpack.c.h.b16 %v67
    %v281 = vunpack.c.l.b16 %v68
    %v282 = vunpack.c.h.b16 %v68
    %v283 = vunpack.c.l.b16 %v69
    %v284 = vunpack.c.h.b16 %v69
    %v285 = vunpack.c.l.b16 %v70
    %v286 = vunpack.c.h.b16 %v70
    %v287 = vunpack.c.l.b16 %v71
    %v288 = vunpack.c.h.b16 %v71
    %v289 = vunpack.c.l.b16 %v72
    %v290 = vunpack.c.h.b16 %v72
    %v291 = vunpack.c.l.b16 %v73
    %v292 = vunpack.c.h.b16 %v73
    %v293 = vunpack.c.l.b16 %v74
    %v294 = vunpack.c.h.b16 %v74
    %v295 = vunpack.c.l.b16 %v75
    %v296 = vunpack.c.h.b16 %v75
    %v297 = vunpack.c.l.b16 %v76
    %v298 = vunpack.c.h.b16 %v76
    %v299 = vunpack.c.l.b16 %v77
    %v300 = vunpack.c.h.b16 %v77
    %v301 = vunpack.c.l.b16 %v78
    %v302 = vunpack.c.h.b16 %v78
    %v303 = vpack.c.b16 %v177, %v175
    %v304 = vpack.c.b16 %v178, %v176
    %v305 = vpack.c.b16 %v181, %v179
    %v306 = vpack.c.b16 %v182, %v180
    %v307 = vpack.c.b16 %v185, %v183
    %v308 = vpack.c.b16 %v186, %v184
    %v309 = vpack.c.b16 %v189, %v187
    %v310 = vpack.c.b16 %v190, %v188
    %v311 = vpack.c.b16 %v193, %v191
    %v312 = vpack.c.b16 %v194, %v192
    %v313 = vpack.c.b16 %v197, %v195
    %v314 = vpack.c.b16 %v198, %v196
    %v315 = vpack.c.b16 %v201, %v199
    %v316 = vpack.c.b16 %v202, %v200
    %v317 = vpack.c.b16 %v205, %v203
    %v318 = vpack.c.b16 %v206, %v204
    %v319 = vpack.c.b16 %v209, %v207
    %v320 = vpack.c.b16 %v210, %v208
    %v321 = vpack.c.b16 %v213, %v211
    %v322 = vpack.c.b16 %v214, %v212
    %v323 = vpack.c.b16 %v217, %v215
    %v324 = vpack.c.b16 %v218, %v216
    %v325 = vpack.c.b16 %v221, %v219
    %v326 = vpack.c.b16 %v222, %v220
    %v327 = vpack.c.b16 %v225, %v223
    %v328 = vpack.c.b16 %v226, %v224
    %v329 = vpack.c.b16 %v229, %v227
    %v330 = vpack.c.b16 %v230, %v228
    %v331 = vpack.c.b16 %v233, %v231
    %v332 = vpack.c.b16 %v234, %v232
    %v333 = vpack.c.b16 %v237, %v235
    %v334 = vpack.c.b16 %v238, %v236
    %v335 = vpack.c.b16 %v241, %v239
    %v336 = vpack.c.b16 %v242, %v240
    %v337 = vpack.c.b16 %v245, %v243
    %v338 = vpack.c.b16 %v246, %v244
    %v339 = vpack.c.b16 %v249, %v247
    %v340 = vpack.c.b16 %v250, %v248
    %v341 = vpack.c.b16 %v253, %v251
    %v342 = vpack.c.b16 %v254, %v252
    %v343 = vpack.c.b16 %v257, %v255
    %v344 = vpack.c.b16 %v258, %v256
    %v345 = vpack.c.b16 %v261, %v259
    %v346 = vpack.c.b16 %v262, %v260
    %v347 = vpack.c.b16 %v265, %v263
    %v348 = vpack.c.b16 %v266, %v264
    %v349 = vpack.c.b16 %v269, %v267
    %v350 = vpack.c.b16 %v270, %v268
    %v351 = vpack.c.b16 %v273, %v271
    %v352 = vpack.c.b16 %v274, %v272
    %v353 = vpack.c.b16 %v277, %v275
    %v354 = vpack.c.b16 %v278, %v276
    %v355 = vpack.c.b16 %v281, %v279
    %v356 = vpack.c.b16 %v282, %v280
    %v357 = vpack.c.b16 %v285, %v283
    %v358 = vpack.c.b16 %v286, %v284
    %v359 = vpack.c.b16 %v289, %v287
    %v360 = vpack.c.b16 %v290, %v288
    %v361 = vpack.c.b16 %v293, %v291
    %v362 = vpack.c.b16 %v294, %v292
    %v363 = vpack.c.b16 %v297, %v295
    %v364 = vpack.c.b16 %v298, %v296
    %v365 = vpack.c.b16 %v301, %v299
    %v366 = vpack.c.b16 %v302, %v300
    %v463 = vunpack.c.l.b16 %v79
    %v464 = vunpack.c.l.b16 %v80
    %v465 = vunpack.c.l.b16 %v81
    %v466 = vunpack.c.l.b16 %v82
    %v467 = vunpack.c.l.b16 %v83
    %v468 = vunpack.c.l.b16 %v84
    %v469 = vunpack.c.l.b16 %v85
    %v470 = vunpack.c.l.b16 %v86
    %v471 = vunpack.c.l.b16 %v87
    %v472 = vunpack.c.l.b16 %v88
    %v473 = vunpack.c.l.b16 %v89
    %v474 = vunpack.c.l.b16 %v90
    %v475 = vunpack.c.l.b16 %v91
    %v476 = vunpack.c.l.b16 %v92
    %v477 = vunpack.c.l.b16 %v93
    %v478 = vunpack.c.l.b16 %v94
    %v479 = vunpack.c.l.b16 %v95
    %v480 = vunpack.c.l.b16 %v96
    %v481 = vunpack.c.l.b16 %v97
    %v482 = vunpack.c.l.b16 %v98
    %v483 = vunpack.c.l.b16 %v99
    %v484 = vunpack.c.l.b16 %v100
    %v485 = vunpack.c.l.b16 %v101
    %v486 = vunpack.c.l.b16 %v102
    %v487 = vunpack.c.l.b16 %v103
    %v488 = vunpack.c.l.b16 %v104
    %v489 = vunpack.c.l.b16 %v105
    %v490 = vunpack.c.l.b16 %v106
    %v491 = vunpack.c.l.b16 %v107
    %v492 = vunpack.c.l.b16 %v108
    %v493 = vunpack.c.l.b16 %v109
    %v494 = vunpack.c.l.b16 %v110
    %v495 = vpack.c.b16 %v464, %v463
    %v496 = vpack.c.b16 %v466, %v465
    %v497 = vpack.c.b16 %v468, %v467
    %v498 = vpack.c.b16 %v470, %v469
    %v499 = vpack.c.b16 %v472, %v471
    %v500 = vpack.c.b16 %v474, %v473
    %v501 = vpack.c.b16 %v476, %v475
    %v502 = vpack.c.b16 %v478, %v477
    %v503 = vpack.c.b16 %v480, %v479
    %v504 = vpack.c.b16 %v482, %v481
    %v505 = vpack.c.b16 %v484, %v483
    %v506 = vpack.c.b16 %v486, %v485
    %v507 = vpack.c.b16 %v488, %v487
    %v508 = vpack.c.b16 %v490, %v489
    %v509 = vpack.c.b16 %v492, %v491
    %v510 = vpack.c.b16 %v494, %v493
    %527 = vmatpush.bf16.msra.mxu0 %v502
    %528 = vmatpush.bf16.msra.mxu0 %v501
    %529 = vmatpush.bf16.msra.mxu0 %v500
    %530 = vmatpush.bf16.msra.mxu0 %v499
    %531 = vmatpush.bf16.msra.mxu0 %v498
    %532 = vmatpush.bf16.msra.mxu0 %v497
    %533 = vmatpush.bf16.msra.mxu0 %v496
    %534 = vmatpush.bf16.msra.mxu0 %v495
    %535 = vmatmul.bf16.gmra.mxu0 %v303
    %v536 = vpop.f32.mrf.mxu0
    %v537 = vadd.f32 0.0, %v536
    %v538 = vpop.f32.mrf.mxu0
    %v539 = vadd.f32 0.0, %v538
    %540 = vmatmul.bf16.gmra.mxu0 %v305
    %v541 = vpop.f32.mrf.mxu0
    %v542 = vadd.f32 0.0, %v541
    %v543 = vpop.f32.mrf.mxu0
    %v544 = vadd.f32 0.0, %v543
    %545 = vmatmul.bf16.gmra.mxu0 %v307
    %v546 = vpop.f32.mrf.mxu0
    %v547 = vadd.f32 0.0, %v546
    %v548 = vpop.f32.mrf.mxu0
    %v549 = vadd.f32 0.0, %v548
    %550 = vmatmul.bf16.gmra.mxu0 %v309
    %v551 = vpop.f32.mrf.mxu0
    %v552 = vadd.f32 0.0, %v551
    %v553 = vpop.f32.mrf.mxu0
    %v554 = vadd.f32 0.0, %v553
    %555 = vmatmul.bf16.gmra.mxu0 %v311
    %v556 = vpop.f32.mrf.mxu0
    %v557 = vadd.f32 0.0, %v556
    %v558 = vpop.f32.mrf.mxu0
    %v559 = vadd.f32 0.0, %v558
    %560 = vmatmul.bf16.gmra.mxu0 %v313
    %v561 = vpop.f32.mrf.mxu0
    %v562 = vadd.f32 0.0, %v561
    %v563 = vpop.f32.mrf.mxu0
    %v564 = vadd.f32 0.0, %v563
    %565 = vmatmul.bf16.gmra.mxu0 %v315
    %v566 = vpop.f32.mrf.mxu0
    %v567 = vadd.f32 0.0, %v566
    %v568 = vpop.f32.mrf.mxu0
    %v569 = vadd.f32 0.0, %v568
    %570 = vmatmul.bf16.gmra.mxu0 %v317
    %v571 = vpop.f32.mrf.mxu0
    %v572 = vadd.f32 0.0, %v571
    %v573 = vpop.f32.mrf.mxu0
    %v574 = vadd.f32 0.0, %v573
    %575 = vmatmul.bf16.gmra.mxu0 %v319
    %v576 = vpop.f32.mrf.mxu0
    %v577 = vadd.f32 0.0, %v576
    %v578 = vpop.f32.mrf.mxu0
    %v579 = vadd.f32 0.0, %v578
    %580 = vmatmul.bf16.gmra.mxu0 %v321
    %v581 = vpop.f32.mrf.mxu0
    %v582 = vadd.f32 0.0, %v581
    %v583 = vpop.f32.mrf.mxu0
    %v584 = vadd.f32 0.0, %v583
    %585 = vmatmul.bf16.gmra.mxu0 %v323
    %v586 = vpop.f32.mrf.mxu0
    %v587 = vadd.f32 0.0, %v586
    %v588 = vpop.f32.mrf.mxu0
    %v589 = vadd.f32 0.0, %v588
    %590 = vmatmul.bf16.gmra.mxu0 %v325
    %v591 = vpop.f32.mrf.mxu0
    %v592 = vadd.f32 0.0, %v591
    %v593 = vpop.f32.mrf.mxu0
    %v594 = vadd.f32 0.0, %v593
    %595 = vmatmul.bf16.gmra.mxu0 %v327
    %v596 = vpop.f32.mrf.mxu0
    %v597 = vadd.f32 0.0, %v596
    %v598 = vpop.f32.mrf.mxu0
    %v599 = vadd.f32 0.0, %v598
    %600 = vmatmul.bf16.gmra.mxu0 %v329
    %v601 = vpop.f32.mrf.mxu0
    %v602 = vadd.f32 0.0, %v601
    %v603 = vpop.f32.mrf.mxu0
    %v604 = vadd.f32 0.0, %v603
    %605 = vmatmul.bf16.gmra.mxu0 %v331
    %v606 = vpop.f32.mrf.mxu0
    %v607 = vadd.f32 0.0, %v606
    %v608 = vpop.f32.mrf.mxu0
    %v609 = vadd.f32 0.0, %v608
    %610 = vmatmul.bf16.gmra.mxu0 %v333
    %v611 = vpop.f32.mrf.mxu0
    %v612 = vadd.f32 0.0, %v611
    %v613 = vpop.f32.mrf.mxu0
    %v614 = vadd.f32 0.0, %v613
    %615 = vmatmul.bf16.gmra.mxu0 %v335
    %v616 = vpop.f32.mrf.mxu0
    %v617 = vadd.f32 0.0, %v616
    %v618 = vpop.f32.mrf.mxu0
    %v619 = vadd.f32 0.0, %v618
    %620 = vmatmul.bf16.gmra.mxu0 %v337
    %v621 = vpop.f32.mrf.mxu0
    %v622 = vadd.f32 0.0, %v621
    %v623 = vpop.f32.mrf.mxu0
    %v624 = vadd.f32 0.0, %v623
    %625 = vmatmul.bf16.gmra.mxu0 %v339
    %v626 = vpop.f32.mrf.mxu0
    %v627 = vadd.f32 0.0, %v626
    %v628 = vpop.f32.mrf.mxu0
    %v629 = vadd.f32 0.0, %v628
    %630 = vmatmul.bf16.gmra.mxu0 %v341
    %v631 = vpop.f32.mrf.mxu0
    %v632 = vadd.f32 0.0, %v631
    %v633 = vpop.f32.mrf.mxu0
    %v634 = vadd.f32 0.0, %v633
    %635 = vmatmul.bf16.gmra.mxu0 %v343
    %v636 = vpop.f32.mrf.mxu0
    %v637 = vadd.f32 0.0, %v636
    %v638 = vpop.f32.mrf.mxu0
    %v639 = vadd.f32 0.0, %v638
    %640 = vmatmul.bf16.gmra.mxu0 %v345
    %v641 = vpop.f32.mrf.mxu0
    %v642 = vadd.f32 0.0, %v641
    %v643 = vpop.f32.mrf.mxu0
    %v644 = vadd.f32 0.0, %v643
    %645 = vmatmul.bf16.gmra.mxu0 %v347
    %v646 = vpop.f32.mrf.mxu0
    %v647 = vadd.f32 0.0, %v646
    %v648 = vpop.f32.mrf.mxu0
    %v649 = vadd.f32 0.0, %v648
    %650 = vmatmul.bf16.gmra.mxu0 %v349
    %v651 = vpop.f32.mrf.mxu0
    %v652 = vadd.f32 0.0, %v651
    %v653 = vpop.f32.mrf.mxu0
    %v654 = vadd.f32 0.0, %v653
    %655 = vmatmul.bf16.gmra.mxu0 %v351
    %v656 = vpop.f32.mrf.mxu0
    %v657 = vadd.f32 0.0, %v656
    %v658 = vpop.f32.mrf.mxu0
    %v659 = vadd.f32 0.0, %v658
    %660 = vmatmul.bf16.gmra.mxu0 %v353
    %v661 = vpop.f32.mrf.mxu0
    %v662 = vadd.f32 0.0, %v661
    %v663 = vpop.f32.mrf.mxu0
    %v664 = vadd.f32 0.0, %v663
    %665 = vmatmul.bf16.gmra.mxu0 %v355
    %v666 = vpop.f32.mrf.mxu0
    %v667 = vadd.f32 0.0, %v666
    %v668 = vpop.f32.mrf.mxu0
    %v669 = vadd.f32 0.0, %v668
    %670 = vmatmul.bf16.gmra.mxu0 %v357
    %v671 = vpop.f32.mrf.mxu0
    %v672 = vadd.f32 0.0, %v671
    %v673 = vpop.f32.mrf.mxu0
    %v674 = vadd.f32 0.0, %v673
    %675 = vmatmul.bf16.gmra.mxu0 %v359
    %v676 = vpop.f32.mrf.mxu0
    %v677 = vadd.f32 0.0, %v676
    %v678 = vpop.f32.mrf.mxu0
    %v679 = vadd.f32 0.0, %v678
    %680 = vmatmul.bf16.gmra.mxu0 %v361
    %v681 = vpop.f32.mrf.mxu0
    %v682 = vadd.f32 0.0, %v681
    %v683 = vpop.f32.mrf.mxu0
    %v684 = vadd.f32 0.0, %v683
    %685 = vmatmul.bf16.gmra.mxu0 %v363
    %v686 = vpop.f32.mrf.mxu0
    %v687 = vadd.f32 0.0, %v686
    %v688 = vpop.f32.mrf.mxu0
    %v689 = vadd.f32 0.0, %v688
    %690 = vmatmul.bf16.gmra.mxu0 %v365
    %v691 = vpop.f32.mrf.mxu0
    %v692 = vadd.f32 0.0, %v691
    %v693 = vpop.f32.mrf.mxu0
    %v694 = vadd.f32 0.0, %v693
    %695 = vdwg.mxu0
    %696 = vmatpush.bf16.msra.mxu0 %v510
    %697 = vmatpush.bf16.msra.mxu0 %v509
    %698 = vmatpush.bf16.msra.mxu0 %v508
    %699 = vmatpush.bf16.msra.mxu0 %v507
    %700 = vmatpush.bf16.msra.mxu0 %v506
    %701 = vmatpush.bf16.msra.mxu0 %v505
    %702 = vmatpush.bf16.msra.mxu0 %v504
    %703 = vmatpush.bf16.msra.mxu0 %v503
    %704 = vmatmul.bf16.gmra.mxu0 %v304
    %v705 = vpop.f32.mrf.mxu0
    %v706 = vadd.f32 %v537, %v705
    %v707 = vpop.f32.mrf.mxu0
    %v708 = vadd.f32 %v539, %v707
    %709 = vmatmul.bf16.gmra.mxu0 %v306
    %v710 = vpop.f32.mrf.mxu0
    %v711 = vadd.f32 %v542, %v710
    %v712 = vpop.f32.mrf.mxu0
    %v713 = vadd.f32 %v544, %v712
    %714 = vmatmul.bf16.gmra.mxu0 %v308
    %v715 = vpop.f32.mrf.mxu0
    %v716 = vadd.f32 %v547, %v715
    %v717 = vpop.f32.mrf.mxu0
    %v718 = vadd.f32 %v549, %v717
    %719 = vmatmul.bf16.gmra.mxu0 %v310
    %v720 = vpop.f32.mrf.mxu0
    %v721 = vadd.f32 %v552, %v720
    %v722 = vpop.f32.mrf.mxu0
    %v723 = vadd.f32 %v554, %v722
    %724 = vmatmul.bf16.gmra.mxu0 %v312
    %v725 = vpop.f32.mrf.mxu0
    %v726 = vadd.f32 %v557, %v725
    %v727 = vpop.f32.mrf.mxu0
    %v728 = vadd.f32 %v559, %v727
    %729 = vmatmul.bf16.gmra.mxu0 %v314
    %v730 = vpop.f32.mrf.mxu0
    %v731 = vadd.f32 %v562, %v730
    %v732 = vpop.f32.mrf.mxu0
    %v733 = vadd.f32 %v564, %v732
    %734 = vmatmul.bf16.gmra.mxu0 %v316
    %v735 = vpop.f32.mrf.mxu0
    %v736 = vadd.f32 %v567, %v735
    %v737 = vpop.f32.mrf.mxu0
    %v738 = vadd.f32 %v569, %v737
    %739 = vmatmul.bf16.gmra.mxu0 %v318
    %v740 = vpop.f32.mrf.mxu0
    %v741 = vadd.f32 %v572, %v740
    %v742 = vpop.f32.mrf.mxu0
    %v743 = vadd.f32 %v574, %v742
    %744 = vmatmul.bf16.gmra.mxu0 %v320
    %v745 = vpop.f32.mrf.mxu0
    %v746 = vadd.f32 %v577, %v745
    %v747 = vpop.f32.mrf.mxu0
    %v748 = vadd.f32 %v579, %v747
    %749 = vmatmul.bf16.gmra.mxu0 %v322
    %v750 = vpop.f32.mrf.mxu0
    %v751 = vadd.f32 %v582, %v750
    %v752 = vpop.f32.mrf.mxu0
    %v753 = vadd.f32 %v584, %v752
    %754 = vmatmul.bf16.gmra.mxu0 %v324
    %v755 = vpop.f32.mrf.mxu0
    %v756 = vadd.f32 %v587, %v755
    %v757 = vpop.f32.mrf.mxu0
    %v758 = vadd.f32 %v589, %v757
    %759 = vmatmul.bf16.gmra.mxu0 %v326
    %v760 = vpop.f32.mrf.mxu0
    %v761 = vadd.f32 %v592, %v760
    %v762 = vpop.f32.mrf.mxu0
    %v763 = vadd.f32 %v594, %v762
    %764 = vmatmul.bf16.gmra.mxu0 %v328
    %v765 = vpop.f32.mrf.mxu0
    %v766 = vadd.f32 %v597, %v765
    %v767 = vpop.f32.mrf.mxu0
    %v768 = vadd.f32 %v599, %v767
    %769 = vmatmul.bf16.gmra.mxu0 %v330
    %v770 = vpop.f32.mrf.mxu0
    %v771 = vadd.f32 %v602, %v770
    %v772 = vpop.f32.mrf.mxu0
    %v773 = vadd.f32 %v604, %v772
    %774 = vmatmul.bf16.gmra.mxu0 %v332
    %v775 = vpop.f32.mrf.mxu0
    %v776 = vadd.f32 %v607, %v775
    %v777 = vpop.f32.mrf.mxu0
    %v778 = vadd.f32 %v609, %v777
    %779 = vmatmul.bf16.gmra.mxu0 %v334
    %v780 = vpop.f32.mrf.mxu0
    %v781 = vadd.f32 %v612, %v780
    %v782 = vpop.f32.mrf.mxu0
    %v783 = vadd.f32 %v614, %v782
    %784 = vmatmul.bf16.gmra.mxu0 %v336
    %v785 = vpop.f32.mrf.mxu0
    %v786 = vadd.f32 %v617, %v785
    %v787 = vpop.f32.mrf.mxu0
    %v788 = vadd.f32 %v619, %v787
    %789 = vmatmul.bf16.gmra.mxu0 %v338
    %v790 = vpop.f32.mrf.mxu0
    %v791 = vadd.f32 %v622, %v790
    %v792 = vpop.f32.mrf.mxu0
    %v793 = vadd.f32 %v624, %v792
    %794 = vmatmul.bf16.gmra.mxu0 %v340
    %v795 = vpop.f32.mrf.mxu0
    %v796 = vadd.f32 %v627, %v795
    %v797 = vpop.f32.mrf.mxu0
    %v798 = vadd.f32 %v629, %v797
    %799 = vmatmul.bf16.gmra.mxu0 %v342
    %v800 = vpop.f32.mrf.mxu0
    %v801 = vadd.f32 %v632, %v800
    %v802 = vpop.f32.mrf.mxu0
    %v803 = vadd.f32 %v634, %v802
    %804 = vmatmul.bf16.gmra.mxu0 %v344
    %v805 = vpop.f32.mrf.mxu0
    %v806 = vadd.f32 %v637, %v805
    %v807 = vpop.f32.mrf.mxu0
    %v808 = vadd.f32 %v639, %v807
    %809 = vmatmul.bf16.gmra.mxu0 %v346
    %v810 = vpop.f32.mrf.mxu0
    %v811 = vadd.f32 %v642, %v810
    %v812 = vpop.f32.mrf.mxu0
    %v813 = vadd.f32 %v644, %v812
    %814 = vmatmul.bf16.gmra.mxu0 %v348
    %v815 = vpop.f32.mrf.mxu0
    %v816 = vadd.f32 %v647, %v815
    %v817 = vpop.f32.mrf.mxu0
    %v818 = vadd.f32 %v649, %v817
    %819 = vmatmul.bf16.gmra.mxu0 %v350
    %v820 = vpop.f32.mrf.mxu0
    %v821 = vadd.f32 %v652, %v820
    %v822 = vpop.f32.mrf.mxu0
    %v823 = vadd.f32 %v654, %v822
    %824 = vmatmul.bf16.gmra.mxu0 %v352
    %v825 = vpop.f32.mrf.mxu0
    %v826 = vadd.f32 %v657, %v825
    %v827 = vpop.f32.mrf.mxu0
    %v828 = vadd.f32 %v659, %v827
    %829 = vmatmul.bf16.gmra.mxu0 %v354
    %v830 = vpop.f32.mrf.mxu0
    %v831 = vadd.f32 %v662, %v830
    %v832 = vpop.f32.mrf.mxu0
    %v833 = vadd.f32 %v664, %v832
    %834 = vmatmul.bf16.gmra.mxu0 %v356
    %v835 = vpop.f32.mrf.mxu0
    %v836 = vadd.f32 %v667, %v835
    %v837 = vpop.f32.mrf.mxu0
    %v838 = vadd.f32 %v669, %v837
    %839 = vmatmul.bf16.gmra.mxu0 %v358
    %v840 = vpop.f32.mrf.mxu0
    %v841 = vadd.f32 %v672, %v840
    %v842 = vpop.f32.mrf.mxu0
    %v843 = vadd.f32 %v674, %v842
    %844 = vmatmul.bf16.gmra.mxu0 %v360
    %v845 = vpop.f32.mrf.mxu0
    %v846 = vadd.f32 %v677, %v845
    %v847 = vpop.f32.mrf.mxu0
    %v848 = vadd.f32 %v679, %v847
    %849 = vmatmul.bf16.gmra.mxu0 %v362
    %v850 = vpop.f32.mrf.mxu0
    %v851 = vadd.f32 %v682, %v850
    %v852 = vpop.f32.mrf.mxu0
    %v853 = vadd.f32 %v684, %v852
    %854 = vmatmul.bf16.gmra.mxu0 %v364
    %v855 = vpop.f32.mrf.mxu0
    %v856 = vadd.f32 %v687, %v855
    %v857 = vpop.f32.mrf.mxu0
    %v858 = vadd.f32 %v689, %v857
    %859 = vmatmul.bf16.gmra.mxu0 %v366
    %v860 = vpop.f32.mrf.mxu0
    %v861 = vadd.f32 %v692, %v860
    %v862 = vpop.f32.mrf.mxu0
    %v863 = vadd.f32 %v694, %v862
    %864 = vdwg.mxu0
    %p865 = scmp.eq.s32.totalorder 0, 0
    // Predicated region
    $region14: #{conv2d_bn_mm.1} parent=1 // pred_check
      %p866 = pneg %p865
    $region15: #{conv2d_bn_mm.1} parent=1 // pred_check_branch
      %868 = sbr.rel (%p866) target = $region17
    $region16: #{conv2d_bn_mm.1} parent=1 // pred_region
      %869 = vst [vmem:[#allocation2] sm:$0xff] %v706
      %870 = vst [vmem:[#allocation2 + $0x8] sm:$0xff] %v708
      %871 = vst [vmem:[#allocation2 + $0x10] sm:$0xff] %v711
      %872 = vst [vmem:[#allocation2 + $0x18] sm:$0xff] %v713
      %873 = vst [vmem:[#allocation2 + $0x20] sm:$0xff] %v716
      %874 = vst [vmem:[#allocation2 + $0x28] sm:$0xff] %v718
      %875 = vst [vmem:[#allocation2 + $0x30] sm:$0xff] %v721
      %876 = vst [vmem:[#allocation2 + $0x38] sm:$0xff] %v723
      %877 = vst [vmem:[#allocation2 + $0x40] sm:$0xff] %v726
      %878 = vst [vmem:[#allocation2 + $0x48] sm:$0xff] %v728
      %879 = vst [vmem:[#allocation2 + $0x50] sm:$0xff] %v731
      %880 = vst [vmem:[#allocation2 + $0x58] sm:$0xff] %v733
      %881 = vst [vmem:[#allocation2 + $0x60] sm:$0xff] %v736
      %882 = vst [vmem:[#allocation2 + $0x68] sm:$0xff] %v738
      %883 = vst [vmem:[#allocation2 + $0x70] sm:$0xff] %v741
      %884 = vst [vmem:[#allocation2 + $0x78] sm:$0xff] %v743
      %885 = vst [vmem:[#allocation2 + $0x80] sm:$0xff] %v746
      %886 = vst [vmem:[#allocation2 + $0x88] sm:$0xff] %v748
      %887 = vst [vmem:[#allocation2 + $0x90] sm:$0xff] %v751
      %888 = vst [vmem:[#allocation2 + $0x98] sm:$0xff] %v753
      %889 = vst [vmem:[#allocation2 + $0xa0] sm:$0xff] %v756
      %890 = vst [vmem:[#allocation2 + $0xa8] sm:$0xff] %v758
      %891 = vst [vmem:[#allocation2 + $0xb0] sm:$0xff] %v761
      %892 = vst [vmem:[#allocation2 + $0xb8] sm:$0xff] %v763
      %893 = vst [vmem:[#allocation2 + $0xc0] sm:$0xff] %v766
      %894 = vst [vmem:[#allocation2 + $0xc8] sm:$0xff] %v768
      %895 = vst [vmem:[#allocation2 + $0xd0] sm:$0xff] %v771
      %896 = vst [vmem:[#allocation2 + $0xd8] sm:$0xff] %v773
      %897 = vst [vmem:[#allocation2 + $0xe0] sm:$0xff] %v776
      %898 = vst [vmem:[#allocation2 + $0xe8] sm:$0xff] %v778
      %899 = vst [vmem:[#allocation2 + $0xf0] sm:$0xff] %v781
      %900 = vst [vmem:[#allocation2 + $0xf8] sm:$0xff] %v783
      %901 = vst [vmem:[#allocation2 + $0x100] sm:$0xff] %v786
      %902 = vst [vmem:[#allocation2 + $0x108] sm:$0xff] %v788
      %903 = vst [vmem:[#allocation2 + $0x110] sm:$0xff] %v791
      %904 = vst [vmem:[#allocation2 + $0x118] sm:$0xff] %v793
      %905 = vst [vmem:[#allocation2 + $0x120] sm:$0xff] %v796
      %906 = vst [vmem:[#allocation2 + $0x128] sm:$0xff] %v798
      %907 = vst [vmem:[#allocation2 + $0x130] sm:$0xff] %v801
      %908 = vst [vmem:[#allocation2 + $0x138] sm:$0xff] %v803
      %909 = vst [vmem:[#allocation2 + $0x140] sm:$0xff] %v806
      %910 = vst [vmem:[#allocation2 + $0x148] sm:$0xff] %v808
      %911 = vst [vmem:[#allocation2 + $0x150] sm:$0xff] %v811
      %912 = vst [vmem:[#allocation2 + $0x158] sm:$0xff] %v813
      %913 = vst [vmem:[#allocation2 + $0x160] sm:$0xff] %v816
      %914 = vst [vmem:[#allocation2 + $0x168] sm:$0xff] %v818
      %915 = vst [vmem:[#allocation2 + $0x170] sm:$0xff] %v821
      %916 = vst [vmem:[#allocation2 + $0x178] sm:$0xff] %v823
      %917 = vst [vmem:[#allocation2 + $0x180] sm:$0xff] %v826
      %918 = vst [vmem:[#allocation2 + $0x188] sm:$0xff] %v828
      %919 = vst [vmem:[#allocation2 + $0x190] sm:$0xff] %v831
      %920 = vst [vmem:[#allocation2 + $0x198] sm:$0xff] %v833
      %921 = vst [vmem:[#allocation2 + $0x1a0] sm:$0xff] %v836
      %922 = vst [vmem:[#allocation2 + $0x1a8] sm:$0xff] %v838
      %923 = vst [vmem:[#allocation2 + $0x1b0] sm:$0xff] %v841
      %924 = vst [vmem:[#allocation2 + $0x1b8] sm:$0xff] %v843
      %925 = vst [vmem:[#allocation2 + $0x1c0] sm:$0xff] %v846
      %926 = vst [vmem:[#allocation2 + $0x1c8] sm:$0xff] %v848
      %927 = vst [vmem:[#allocation2 + $0x1d0] sm:$0xff] %v851
      %928 = vst [vmem:[#allocation2 + $0x1d8] sm:$0xff] %v853
      %929 = vst [vmem:[#allocation2 + $0x1e0] sm:$0xff] %v856
      %930 = vst [vmem:[#allocation2 + $0x1e8] sm:$0xff] %v858
      %931 = vst [vmem:[#allocation2 + $0x1f0] sm:$0xff] %v861
      %932 = vst [vmem:[#allocation2 + $0x1f8] sm:$0xff] %v863
    $region17: #{conv2d_bn_mm.1} parent=1 // pred_fallthru
      _
    %p933 = scmp.gt.s32.totalorder 0, 0
    // Predicated region
    $region18: #{conv2d_bn_mm.1} parent=1 // pred_check
      %p934 = pneg %p933
    $region19: #{conv2d_bn_mm.1} parent=1 // pred_check_branch
      %936 = sbr.rel (%p934) target = $region21
    $region20: #{conv2d_bn_mm.1} parent=1 // pred_region
      %v937 = vld [vmem:[#allocation2] sm:$0xff]
      %v938 = vld [vmem:[#allocation2 + $0x8] sm:$0xff]
      %v939 = vld [vmem:[#allocation2 + $0x10] sm:$0xff]
      %v940 = vld [vmem:[#allocation2 + $0x18] sm:$0xff]
      %v941 = vld [vmem:[#allocation2 + $0x20] sm:$0xff]
      %v942 = vld [vmem:[#allocation2 + $0x28] sm:$0xff]
      %v943 = vld [vmem:[#allocation2 + $0x30] sm:$0xff]
      %v944 = vld [vmem:[#allocation2 + $0x38] sm:$0xff]
      %v945 = vld [vmem:[#allocation2 + $0x40] sm:$0xff]
      %v946 = vld [vmem:[#allocation2 + $0x48] sm:$0xff]
      %v947 = vld [vmem:[#allocation2 + $0x50] sm:$0xff]
      %v948 = vld [vmem:[#allocation2 + $0x58] sm:$0xff]
      %v949 = vld [vmem:[#allocation2 + $0x60] sm:$0xff]
      %v950 = vld [vmem:[#allocation2 + $0x68] sm:$0xff]
      %v951 = vld [vmem:[#allocation2 + $0x70] sm:$0xff]
      %v952 = vld [vmem:[#allocation2 + $0x78] sm:$0xff]
      %v953 = vld [vmem:[#allocation2 + $0x80] sm:$0xff]
      %v954 = vld [vmem:[#allocation2 + $0x88] sm:$0xff]
      %v955 = vld [vmem:[#allocation2 + $0x90] sm:$0xff]
      %v956 = vld [vmem:[#allocation2 + $0x98] sm:$0xff]
      %v957 = vld [vmem:[#allocation2 + $0xa0] sm:$0xff]
      %v958 = vld [vmem:[#allocation2 + $0xa8] sm:$0xff]
      %v959 = vld [vmem:[#allocation2 + $0xb0] sm:$0xff]
      %v960 = vld [vmem:[#allocation2 + $0xb8] sm:$0xff]
      %v961 = vld [vmem:[#allocation2 + $0xc0] sm:$0xff]
      %v962 = vld [vmem:[#allocation2 + $0xc8] sm:$0xff]
      %v963 = vld [vmem:[#allocation2 + $0xd0] sm:$0xff]
      %v964 = vld [vmem:[#allocation2 + $0xd8] sm:$0xff]
      %v965 = vld [vmem:[#allocation2 + $0xe0] sm:$0xff]
      %v966 = vld [vmem:[#allocation2 + $0xe8] sm:$0xff]
      %v967 = vld [vmem:[#allocation2 + $0xf0] sm:$0xff]
      %v968 = vld [vmem:[#allocation2 + $0xf8] sm:$0xff]
      %v969 = vld [vmem:[#allocation2 + $0x100] sm:$0xff]
      %v970 = vld [vmem:[#allocation2 + $0x108] sm:$0xff]
      %v971 = vld [vmem:[#allocation2 + $0x110] sm:$0xff]
      %v972 = vld [vmem:[#allocation2 + $0x118] sm:$0xff]
      %v973 = vld [vmem:[#allocation2 + $0x120] sm:$0xff]
      %v974 = vld [vmem:[#allocation2 + $0x128] sm:$0xff]
      %v975 = vld [vmem:[#allocation2 + $0x130] sm:$0xff]
      %v976 = vld [vmem:[#allocation2 + $0x138] sm:$0xff]
      %v977 = vld [vmem:[#allocation2 + $0x140] sm:$0xff]
      %v978 = vld [vmem:[#allocation2 + $0x148] sm:$0xff]
      %v979 = vld [vmem:[#allocation2 + $0x150] sm:$0xff]
      %v980 = vld [vmem:[#allocation2 + $0x158] sm:$0xff]
      %v981 = vld [vmem:[#allocation2 + $0x160] sm:$0xff]
      %v982 = vld [vmem:[#allocation2 + $0x168] sm:$0xff]
      %v983 = vld [vmem:[#allocation2 + $0x170] sm:$0xff]
      %v984 = vld [vmem:[#allocation2 + $0x178] sm:$0xff]
      %v985 = vld [vmem:[#allocation2 + $0x180] sm:$0xff]
      %v986 = vld [vmem:[#allocation2 + $0x188] sm:$0xff]
      %v987 = vld [vmem:[#allocation2 + $0x190] sm:$0xff]
      %v988 = vld [vmem:[#allocation2 + $0x198] sm:$0xff]
      %v989 = vld [vmem:[#allocation2 + $0x1a0] sm:$0xff]
      %v990 = vld [vmem:[#allocation2 + $0x1a8] sm:$0xff]
      %v991 = vld [vmem:[#allocation2 + $0x1b0] sm:$0xff]
      %v992 = vld [vmem:[#allocation2 + $0x1b8] sm:$0xff]
      %v993 = vld [vmem:[#allocation2 + $0x1c0] sm:$0xff]
      %v994 = vld [vmem:[#allocation2 + $0x1c8] sm:$0xff]
      %v995 = vld [vmem:[#allocation2 + $0x1d0] sm:$0xff]
      %v996 = vld [vmem:[#allocation2 + $0x1d8] sm:$0xff]
      %v997 = vld [vmem:[#allocation2 + $0x1e0] sm:$0xff]
      %v998 = vld [vmem:[#allocation2 + $0x1e8] sm:$0xff]
      %v999 = vld [vmem:[#allocation2 + $0x1f0] sm:$0xff]
      %v1000 = vld [vmem:[#allocation2 + $0x1f8] sm:$0xff]
      %v1001 = vadd.f32 %v937, %v706
      %v1002 = vadd.f32 %v938, %v708
      %v1003 = vadd.f32 %v939, %v711
      %v1004 = vadd.f32 %v940, %v713
      %v1005 = vadd.f32 %v941, %v716
      %v1006 = vadd.f32 %v942, %v718
      %v1007 = vadd.f32 %v943, %v721
      %v1008 = vadd.f32 %v944, %v723
      %v1009 = vadd.f32 %v945, %v726
      %v1010 = vadd.f32 %v946, %v728
      %v1011 = vadd.f32 %v947, %v731
      %v1012 = vadd.f32 %v948, %v733
      %v1013 = vadd.f32 %v949, %v736
      %v1014 = vadd.f32 %v950, %v738
      %v1015 = vadd.f32 %v951, %v741
      %v1016 = vadd.f32 %v952, %v743
      %v1017 = vadd.f32 %v953, %v746
      %v1018 = vadd.f32 %v954, %v748
      %v1019 = vadd.f32 %v955, %v751
      %v1020 = vadd.f32 %v956, %v753
      %v1021 = vadd.f32 %v957, %v756
      %v1022 = vadd.f32 %v958, %v758
      %v1023 = vadd.f32 %v959, %v761
      %v1024 = vadd.f32 %v960, %v763
      %v1025 = vadd.f32 %v961, %v766
      %v1026 = vadd.f32 %v962, %v768
      %v1027 = vadd.f32 %v963, %v771
      %v1028 = vadd.f32 %v964, %v773
      %v1029 = vadd.f32 %v965, %v776
      %v1030 = vadd.f32 %v966, %v778
      %v1031 = vadd.f32 %v967, %v781
      %v1032 = vadd.f32 %v968, %v783
      %v1033 = vadd.f32 %v969, %v786
      %v1034 = vadd.f32 %v970, %v788
      %v1035 = vadd.f32 %v971, %v791
      %v1036 = vadd.f32 %v972, %v793
      %v1037 = vadd.f32 %v973, %v796
      %v1038 = vadd.f32 %v974, %v798
      %v1039 = vadd.f32 %v975, %v801
      %v1040 = vadd.f32 %v976, %v803
      %v1041 = vadd.f32 %v977, %v806
      %v1042 = vadd.f32 %v978, %v808
      %v1043 = vadd.f32 %v979, %v811
      %v1044 = vadd.f32 %v980, %v813
      %v1045 = vadd.f32 %v981, %v816
      %v1046 = vadd.f32 %v982, %v818
      %v1047 = vadd.f32 %v983, %v821
      %v1048 = vadd.f32 %v984, %v823
      %v1049 = vadd.f32 %v985, %v826
      %v1050 = vadd.f32 %v986, %v828
      %v1051 = vadd.f32 %v987, %v831
      %v1052 = vadd.f32 %v988, %v833
      %v1053 = vadd.f32 %v989, %v836
      %v1054 = vadd.f32 %v990, %v838
      %v1055 = vadd.f32 %v991, %v841
      %v1056 = vadd.f32 %v992, %v843
      %v1057 = vadd.f32 %v993, %v846
      %v1058 = vadd.f32 %v994, %v848
      %v1059 = vadd.f32 %v995, %v851
      %v1060 = vadd.f32 %v996, %v853
      %v1061 = vadd.f32 %v997, %v856
      %v1062 = vadd.f32 %v998, %v858
      %v1063 = vadd.f32 %v999, %v861
      %v1064 = vadd.f32 %v1000, %v863
      %1065 = vst [vmem:[#allocation2] sm:$0xff] %v1001
      %1066 = vst [vmem:[#allocation2 + $0x8] sm:$0xff] %v1002
      %1067 = vst [vmem:[#allocation2 + $0x10] sm:$0xff] %v1003
      %1068 = vst [vmem:[#allocation2 + $0x18] sm:$0xff] %v1004
      %1069 = vst [vmem:[#allocation2 + $0x20] sm:$0xff] %v1005
      %1070 = vst [vmem:[#allocation2 + $0x28] sm:$0xff] %v1006
      %1071 = vst [vmem:[#allocation2 + $0x30] sm:$0xff] %v1007
      %1072 = vst [vmem:[#allocation2 + $0x38] sm:$0xff] %v1008
      %1073 = vst [vmem:[#allocation2 + $0x40] sm:$0xff] %v1009
      %1074 = vst [vmem:[#allocation2 + $0x48] sm:$0xff] %v1010
      %1075 = vst [vmem:[#allocation2 + $0x50] sm:$0xff] %v1011
      %1076 = vst [vmem:[#allocation2 + $0x58] sm:$0xff] %v1012
      %1077 = vst [vmem:[#allocation2 + $0x60] sm:$0xff] %v1013
      %1078 = vst [vmem:[#allocation2 + $0x68] sm:$0xff] %v1014
      %1079 = vst [vmem:[#allocation2 + $0x70] sm:$0xff] %v1015
      %1080 = vst [vmem:[#allocation2 + $0x78] sm:$0xff] %v1016
      %1081 = vst [vmem:[#allocation2 + $0x80] sm:$0xff] %v1017
      %1082 = vst [vmem:[#allocation2 + $0x88] sm:$0xff] %v1018
      %1083 = vst [vmem:[#allocation2 + $0x90] sm:$0xff] %v1019
      %1084 = vst [vmem:[#allocation2 + $0x98] sm:$0xff] %v1020
      %1085 = vst [vmem:[#allocation2 + $0xa0] sm:$0xff] %v1021
      %1086 = vst [vmem:[#allocation2 + $0xa8] sm:$0xff] %v1022
      %1087 = vst [vmem:[#allocation2 + $0xb0] sm:$0xff] %v1023
      %1088 = vst [vmem:[#allocation2 + $0xb8] sm:$0xff] %v1024
      %1089 = vst [vmem:[#allocation2 + $0xc0] sm:$0xff] %v1025
      %1090 = vst [vmem:[#allocation2 + $0xc8] sm:$0xff] %v1026
      %1091 = vst [vmem:[#allocation2 + $0xd0] sm:$0xff] %v1027
      %1092 = vst [vmem:[#allocation2 + $0xd8] sm:$0xff] %v1028
      %1093 = vst [vmem:[#allocation2 + $0xe0] sm:$0xff] %v1029
      %1094 = vst [vmem:[#allocation2 + $0xe8] sm:$0xff] %v1030
      %1095 = vst [vmem:[#allocation2 + $0xf0] sm:$0xff] %v1031
      %1096 = vst [vmem:[#allocation2 + $0xf8] sm:$0xff] %v1032
      %1097 = vst [vmem:[#allocation2 + $0x100] sm:$0xff] %v1033
      %1098 = vst [vmem:[#allocation2 + $0x108] sm:$0xff] %v1034
      %1099 = vst [vmem:[#allocation2 + $0x110] sm:$0xff] %v1035
      %1100 = vst [vmem:[#allocation2 + $0x118] sm:$0xff] %v1036
      %1101 = vst [vmem:[#allocation2 + $0x120] sm:$0xff] %v1037
      %1102 = vst [vmem:[#allocation2 + $0x128] sm:$0xff] %v1038
      %1103 = vst [vmem:[#allocation2 + $0x130] sm:$0xff] %v1039
      %1104 = vst [vmem:[#allocation2 + $0x138] sm:$0xff] %v1040
      %1105 = vst [vmem:[#allocation2 + $0x140] sm:$0xff] %v1041
      %1106 = vst [vmem:[#allocation2 + $0x148] sm:$0xff] %v1042
      %1107 = vst [vmem:[#allocation2 + $0x150] sm:$0xff] %v1043
      %1108 = vst [vmem:[#allocation2 + $0x158] sm:$0xff] %v1044
      %1109 = vst [vmem:[#allocation2 + $0x160] sm:$0xff] %v1045
      %1110 = vst [vmem:[#allocation2 + $0x168] sm:$0xff] %v1046
      %1111 = vst [vmem:[#allocation2 + $0x170] sm:$0xff] %v1047
      %1112 = vst [vmem:[#allocation2 + $0x178] sm:$0xff] %v1048
      %1113 = vst [vmem:[#allocation2 + $0x180] sm:$0xff] %v1049
      %1114 = vst [vmem:[#allocation2 + $0x188] sm:$0xff] %v1050
      %1115 = vst [vmem:[#allocation2 + $0x190] sm:$0xff] %v1051
      %1116 = vst [vmem:[#allocation2 + $0x198] sm:$0xff] %v1052
      %1117 = vst [vmem:[#allocation2 + $0x1a0] sm:$0xff] %v1053
      %1118 = vst [vmem:[#allocation2 + $0x1a8] sm:$0xff] %v1054
      %1119 = vst [vmem:[#allocation2 + $0x1b0] sm:$0xff] %v1055
      %1120 = vst [vmem:[#allocation2 + $0x1b8] sm:$0xff] %v1056
      %1121 = vst [vmem:[#allocation2 + $0x1c0] sm:$0xff] %v1057
      %1122 = vst [vmem:[#allocation2 + $0x1c8] sm:$0xff] %v1058
      %1123 = vst [vmem:[#allocation2 + $0x1d0] sm:$0xff] %v1059
      %1124 = vst [vmem:[#allocation2 + $0x1d8] sm:$0xff] %v1060
      %1125 = vst [vmem:[#allocation2 + $0x1e0] sm:$0xff] %v1061
      %1126 = vst [vmem:[#allocation2 + $0x1e8] sm:$0xff] %v1062
      %1127 = vst [vmem:[#allocation2 + $0x1f0] sm:$0xff] %v1063
      %1128 = vst [vmem:[#allocation2 + $0x1f8] sm:$0xff] %v1064
    $region21: #{conv2d_bn_mm.1} parent=1 // pred_fallthru
      _
    // Predicated region
    $region22: #{conv2d_bn_mm.1} parent=1 // pred_check
      %p1129 = pneg %p865
    $region23: #{conv2d_bn_mm.1} parent=1 // pred_check_branch
      %1131 = sbr.rel (%p1129) target = $region25
    $region24: #{conv2d_bn_mm.1} parent=1 // pred_region
      %v1132 = vld [vmem:[#allocation2] sm:$0xff]
      %v1133 = vld [vmem:[#allocation2 + $0x8] sm:$0xff]
      %v1134 = vld [vmem:[#allocation2 + $0x10] sm:$0xff]
      %v1135 = vld [vmem:[#allocation2 + $0x18] sm:$0xff]
      %v1136 = vld [vmem:[#allocation2 + $0x20] sm:$0xff]
      %v1137 = vld [vmem:[#allocation2 + $0x28] sm:$0xff]
      %v1138 = vld [vmem:[#allocation2 + $0x30] sm:$0xff]
      %v1139 = vld [vmem:[#allocation2 + $0x38] sm:$0xff]
      %v1140 = vld [vmem:[#allocation2 + $0x40] sm:$0xff]
      %v1141 = vld [vmem:[#allocation2 + $0x48] sm:$0xff]
      %v1142 = vld [vmem:[#allocation2 + $0x50] sm:$0xff]
      %v1143 = vld [vmem:[#allocation2 + $0x58] sm:$0xff]
      %v1144 = vld [vmem:[#allocation2 + $0x60] sm:$0xff]
      %v1145 = vld [vmem:[#allocation2 + $0x68] sm:$0xff]
      %v1146 = vld [vmem:[#allocation2 + $0x70] sm:$0xff]
      %v1147 = vld [vmem:[#allocation2 + $0x78] sm:$0xff]
      %v1148 = vld [vmem:[#allocation2 + $0x80] sm:$0xff]
      %v1149 = vld [vmem:[#allocation2 + $0x88] sm:$0xff]
      %v1150 = vld [vmem:[#allocation2 + $0x90] sm:$0xff]
      %v1151 = vld [vmem:[#allocation2 + $0x98] sm:$0xff]
      %v1152 = vld [vmem:[#allocation2 + $0xa0] sm:$0xff]
      %v1153 = vld [vmem:[#allocation2 + $0xa8] sm:$0xff]
      %v1154 = vld [vmem:[#allocation2 + $0xb0] sm:$0xff]
      %v1155 = vld [vmem:[#allocation2 + $0xb8] sm:$0xff]
      %v1156 = vld [vmem:[#allocation2 + $0xc0] sm:$0xff]
      %v1157 = vld [vmem:[#allocation2 + $0xc8] sm:$0xff]
      %v1158 = vld [vmem:[#allocation2 + $0xd0] sm:$0xff]
      %v1159 = vld [vmem:[#allocation2 + $0xd8] sm:$0xff]
      %v1160 = vld [vmem:[#allocation2 + $0xe0] sm:$0xff]
      %v1161 = vld [vmem:[#allocation2 + $0xe8] sm:$0xff]
      %v1162 = vld [vmem:[#allocation2 + $0xf0] sm:$0xff]
      %v1163 = vld [vmem:[#allocation2 + $0xf8] sm:$0xff]
      %v1164 = vld [vmem:[#allocation2 + $0x100] sm:$0xff]
      %v1165 = vld [vmem:[#allocation2 + $0x108] sm:$0xff]
      %v1166 = vld [vmem:[#allocation2 + $0x110] sm:$0xff]
      %v1167 = vld [vmem:[#allocation2 + $0x118] sm:$0xff]
      %v1168 = vld [vmem:[#allocation2 + $0x120] sm:$0xff]
      %v1169 = vld [vmem:[#allocation2 + $0x128] sm:$0xff]
      %v1170 = vld [vmem:[#allocation2 + $0x130] sm:$0xff]
      %v1171 = vld [vmem:[#allocation2 + $0x138] sm:$0xff]
      %v1172 = vld [vmem:[#allocation2 + $0x140] sm:$0xff]
      %v1173 = vld [vmem:[#allocation2 + $0x148] sm:$0xff]
      %v1174 = vld [vmem:[#allocation2 + $0x150] sm:$0xff]
      %v1175 = vld [vmem:[#allocation2 + $0x158] sm:$0xff]
      %v1176 = vld [vmem:[#allocation2 + $0x160] sm:$0xff]
      %v1177 = vld [vmem:[#allocation2 + $0x168] sm:$0xff]
      %v1178 = vld [vmem:[#allocation2 + $0x170] sm:$0xff]
      %v1179 = vld [vmem:[#allocation2 + $0x178] sm:$0xff]
      %v1180 = vld [vmem:[#allocation2 + $0x180] sm:$0xff]
      %v1181 = vld [vmem:[#allocation2 + $0x188] sm:$0xff]
      %v1182 = vld [vmem:[#allocation2 + $0x190] sm:$0xff]
      %v1183 = vld [vmem:[#allocation2 + $0x198] sm:$0xff]
      %v1184 = vld [vmem:[#allocation2 + $0x1a0] sm:$0xff]
      %v1185 = vld [vmem:[#allocation2 + $0x1a8] sm:$0xff]
      %v1186 = vld [vmem:[#allocation2 + $0x1b0] sm:$0xff]
      %v1187 = vld [vmem:[#allocation2 + $0x1b8] sm:$0xff]
      %v1188 = vld [vmem:[#allocation2 + $0x1c0] sm:$0xff]
      %v1189 = vld [vmem:[#allocation2 + $0x1c8] sm:$0xff]
      %v1190 = vld [vmem:[#allocation2 + $0x1d0] sm:$0xff]
      %v1191 = vld [vmem:[#allocation2 + $0x1d8] sm:$0xff]
      %v1192 = vld [vmem:[#allocation2 + $0x1e0] sm:$0xff]
      %v1193 = vld [vmem:[#allocation2 + $0x1e8] sm:$0xff]
      %v1194 = vld [vmem:[#allocation2 + $0x1f0] sm:$0xff]
      %v1195 = vld [vmem:[#allocation2 + $0x1f8] sm:$0xff]
      %v1196 = vld [vmem:[%s2] sm:$0x1]
      %v1198 = vperm.slane %v1196, 0
      %v1200 = vadd.f32 %v1132, %v1198
      %v1201 = vadd.f32 %v1133, %v1198
      %v1202 = vadd.f32 %v1134, %v1198
      %v1203 = vadd.f32 %v1135, %v1198
      %v1204 = vadd.f32 %v1136, %v1198
      %v1205 = vadd.f32 %v1137, %v1198
      %v1206 = vadd.f32 %v1138, %v1198
      %v1207 = vadd.f32 %v1139, %v1198
      %v1208 = vadd.f32 %v1140, %v1198
      %v1209 = vadd.f32 %v1141, %v1198
      %v1210 = vadd.f32 %v1142, %v1198
      %v1211 = vadd.f32 %v1143, %v1198
      %v1212 = vadd.f32 %v1144, %v1198
      %v1213 = vadd.f32 %v1145, %v1198
      %v1214 = vadd.f32 %v1146, %v1198
      %v1215 = vadd.f32 %v1147, %v1198
      %v1216 = vadd.f32 %v1148, %v1198
      %v1217 = vadd.f32 %v1149, %v1198
      %v1218 = vadd.f32 %v1150, %v1198
      %v1219 = vadd.f32 %v1151, %v1198
      %v1220 = vadd.f32 %v1152, %v1198
      %v1221 = vadd.f32 %v1153, %v1198
      %v1222 = vadd.f32 %v1154, %v1198
      %v1223 = vadd.f32 %v1155, %v1198
      %v1224 = vadd.f32 %v1156, %v1198
      %v1225 = vadd.f32 %v1157, %v1198
      %v1226 = vadd.f32 %v1158, %v1198
      %v1227 = vadd.f32 %v1159, %v1198
      %v1228 = vadd.f32 %v1160, %v1198
      %v1229 = vadd.f32 %v1161, %v1198
      %v1230 = vadd.f32 %v1162, %v1198
      %v1231 = vadd.f32 %v1163, %v1198
      %v1232 = vadd.f32 %v1164, %v1198
      %v1233 = vadd.f32 %v1165, %v1198
      %v1234 = vadd.f32 %v1166, %v1198
      %v1235 = vadd.f32 %v1167, %v1198
      %v1236 = vadd.f32 %v1168, %v1198
      %v1237 = vadd.f32 %v1169, %v1198
      %v1238 = vadd.f32 %v1170, %v1198
      %v1239 = vadd.f32 %v1171, %v1198
      %v1240 = vadd.f32 %v1172, %v1198
      %v1241 = vadd.f32 %v1173, %v1198
      %v1242 = vadd.f32 %v1174, %v1198
      %v1243 = vadd.f32 %v1175, %v1198
      %v1244 = vadd.f32 %v1176, %v1198
      %v1245 = vadd.f32 %v1177, %v1198
      %v1246 = vadd.f32 %v1178, %v1198
      %v1247 = vadd.f32 %v1179, %v1198
      %v1248 = vadd.f32 %v1180, %v1198
      %v1249 = vadd.f32 %v1181, %v1198
      %v1250 = vadd.f32 %v1182, %v1198
      %v1251 = vadd.f32 %v1183, %v1198
      %v1252 = vadd.f32 %v1184, %v1198
      %v1253 = vadd.f32 %v1185, %v1198
      %v1254 = vadd.f32 %v1186, %v1198
      %v1255 = vadd.f32 %v1187, %v1198
      %v1256 = vadd.f32 %v1188, %v1198
      %v1257 = vadd.f32 %v1189, %v1198
      %v1258 = vadd.f32 %v1190, %v1198
      %v1259 = vadd.f32 %v1191, %v1198
      %v1260 = vadd.f32 %v1192, %v1198
      %v1261 = vadd.f32 %v1193, %v1198
      %v1262 = vadd.f32 %v1194, %v1198
      %v1263 = vadd.f32 %v1195, %v1198
      %v1264 = vmax.f32 %v1200, 0.0
      %v1265 = vmax.f32 %v1201, 0.0
      %v1266 = vmax.f32 %v1202, 0.0
      %v1267 = vmax.f32 %v1203, 0.0
      %v1268 = vmax.f32 %v1204, 0.0
      %v1269 = vmax.f32 %v1205, 0.0
      %v1270 = vmax.f32 %v1206, 0.0
      %v1271 = vmax.f32 %v1207, 0.0
      %v1272 = vmax.f32 %v1208, 0.0
      %v1273 = vmax.f32 %v1209, 0.0
      %v1274 = vmax.f32 %v1210, 0.0
      %v1275 = vmax.f32 %v1211, 0.0
      %v1276 = vmax.f32 %v1212, 0.0
      %v1277 = vmax.f32 %v1213, 0.0
      %v1278 = vmax.f32 %v1214, 0.0
      %v1279 = vmax.f32 %v1215, 0.0
      %v1280 = vmax.f32 %v1216, 0.0
      %v1281 = vmax.f32 %v1217, 0.0
      %v1282 = vmax.f32 %v1218, 0.0
      %v1283 = vmax.f32 %v1219, 0.0
      %v1284 = vmax.f32 %v1220, 0.0
      %v1285 = vmax.f32 %v1221, 0.0
      %v1286 = vmax.f32 %v1222, 0.0
      %v1287 = vmax.f32 %v1223, 0.0
      %v1288 = vmax.f32 %v1224, 0.0
      %v1289 = vmax.f32 %v1225, 0.0
      %v1290 = vmax.f32 %v1226, 0.0
      %v1291 = vmax.f32 %v1227, 0.0
      %v1292 = vmax.f32 %v1228, 0.0
      %v1293 = vmax.f32 %v1229, 0.0
      %v1294 = vmax.f32 %v1230, 0.0
      %v1295 = vmax.f32 %v1231, 0.0
      %v1296 = vmax.f32 %v1232, 0.0
      %v1297 = vmax.f32 %v1233, 0.0
      %v1298 = vmax.f32 %v1234, 0.0
      %v1299 = vmax.f32 %v1235, 0.0
      %v1300 = vmax.f32 %v1236, 0.0
      %v1301 = vmax.f32 %v1237, 0.0
      %v1302 = vmax.f32 %v1238, 0.0
      %v1303 = vmax.f32 %v1239, 0.0
      %v1304 = vmax.f32 %v1240, 0.0
      %v1305 = vmax.f32 %v1241, 0.0
      %v1306 = vmax.f32 %v1242, 0.0
      %v1307 = vmax.f32 %v1243, 0.0
      %v1308 = vmax.f32 %v1244, 0.0
      %v1309 = vmax.f32 %v1245, 0.0
      %v1310 = vmax.f32 %v1246, 0.0
      %v1311 = vmax.f32 %v1247, 0.0
      %v1312 = vmax.f32 %v1248, 0.0
      %v1313 = vmax.f32 %v1249, 0.0
      %v1314 = vmax.f32 %v1250, 0.0
      %v1315 = vmax.f32 %v1251, 0.0
      %v1316 = vmax.f32 %v1252, 0.0
      %v1317 = vmax.f32 %v1253, 0.0
      %v1318 = vmax.f32 %v1254, 0.0
      %v1319 = vmax.f32 %v1255, 0.0
      %v1320 = vmax.f32 %v1256, 0.0
      %v1321 = vmax.f32 %v1257, 0.0
      %v1322 = vmax.f32 %v1258, 0.0
      %v1323 = vmax.f32 %v1259, 0.0
      %v1324 = vmax.f32 %v1260, 0.0
      %v1325 = vmax.f32 %v1261, 0.0
      %v1326 = vmax.f32 %v1262, 0.0
      %v1327 = vmax.f32 %v1263, 0.0
      %v1328 = vpack.c.bf16 %v1264, %v1264
      %v1329 = vpack.c.bf16 %v1265, %v1265
      %v1330 = vpack.c.bf16 %v1266, %v1266
      %v1331 = vpack.c.bf16 %v1267, %v1267
      %v1332 = vpack.c.bf16 %v1268, %v1268
      %v1333 = vpack.c.bf16 %v1269, %v1269
      %v1334 = vpack.c.bf16 %v1270, %v1270
      %v1335 = vpack.c.bf16 %v1271, %v1271
      %v1336 = vpack.c.bf16 %v1272, %v1272
      %v1337 = vpack.c.bf16 %v1273, %v1273
      %v1338 = vpack.c.bf16 %v1274, %v1274
      %v1339 = vpack.c.bf16 %v1275, %v1275
      %v1340 = vpack.c.bf16 %v1276, %v1276
      %v1341 = vpack.c.bf16 %v1277, %v1277
      %v1342 = vpack.c.bf16 %v1278, %v1278
      %v1343 = vpack.c.bf16 %v1279, %v1279
      %v1344 = vpack.c.bf16 %v1280, %v1280
      %v1345 = vpack.c.bf16 %v1281, %v1281
      %v1346 = vpack.c.bf16 %v1282, %v1282
      %v1347 = vpack.c.bf16 %v1283, %v1283
      %v1348 = vpack.c.bf16 %v1284, %v1284
      %v1349 = vpack.c.bf16 %v1285, %v1285
      %v1350 = vpack.c.bf16 %v1286, %v1286
      %v1351 = vpack.c.bf16 %v1287, %v1287
      %v1352 = vpack.c.bf16 %v1288, %v1288
      %v1353 = vpack.c.bf16 %v1289, %v1289
      %v1354 = vpack.c.bf16 %v1290, %v1290
      %v1355 = vpack.c.bf16 %v1291, %v1291
      %v1356 = vpack.c.bf16 %v1292, %v1292
      %v1357 = vpack.c.bf16 %v1293, %v1293
      %v1358 = vpack.c.bf16 %v1294, %v1294
      %v1359 = vpack.c.bf16 %v1295, %v1295
      %v1360 = vpack.c.bf16 %v1296, %v1296
      %v1361 = vpack.c.bf16 %v1297, %v1297
      %v1362 = vpack.c.bf16 %v1298, %v1298
      %v1363 = vpack.c.bf16 %v1299, %v1299
      %v1364 = vpack.c.bf16 %v1300, %v1300
      %v1365 = vpack.c.bf16 %v1301, %v1301
      %v1366 = vpack.c.bf16 %v1302, %v1302
      %v1367 = vpack.c.bf16 %v1303, %v1303
      %v1368 = vpack.c.bf16 %v1304, %v1304
      %v1369 = vpack.c.bf16 %v1305, %v1305
      %v1370 = vpack.c.bf16 %v1306, %v1306
      %v1371 = vpack.c.bf16 %v1307, %v1307
      %v1372 = vpack.c.bf16 %v1308, %v1308
      %v1373 = vpack.c.bf16 %v1309, %v1309
      %v1374 = vpack.c.bf16 %v1310, %v1310
      %v1375 = vpack.c.bf16 %v1311, %v1311
      %v1376 = vpack.c.bf16 %v1312, %v1312
      %v1377 = vpack.c.bf16 %v1313, %v1313
      %v1378 = vpack.c.bf16 %v1314, %v1314
      %v1379 = vpack.c.bf16 %v1315, %v1315
      %v1380 = vpack.c.bf16 %v1316, %v1316
      %v1381 = vpack.c.bf16 %v1317, %v1317
      %v1382 = vpack.c.bf16 %v1318, %v1318
      %v1383 = vpack.c.bf16 %v1319, %v1319
      %v1384 = vpack.c.bf16 %v1320, %v1320
      %v1385 = vpack.c.bf16 %v1321, %v1321
      %v1386 = vpack.c.bf16 %v1322, %v1322
      %v1387 = vpack.c.bf16 %v1323, %v1323
      %v1388 = vpack.c.bf16 %v1324, %v1324
      %v1389 = vpack.c.bf16 %v1325, %v1325
      %v1390 = vpack.c.bf16 %v1326, %v1326
      %v1391 = vpack.c.bf16 %v1327, %v1327
      %1392 = vst [vmem:[#allocation3] sm:$0xf] %v1328
      %1393 = vst [vmem:[#allocation3 + $0x4] sm:$0xf] %v1329
      %1394 = vst [vmem:[#allocation3 + $0x8] sm:$0xf] %v1330
      %1395 = vst [vmem:[#allocation3 + $0xc] sm:$0xf] %v1331
      %1396 = vst [vmem:[#allocation3 + $0x10] sm:$0xf] %v1332
      %1397 = vst [vmem:[#allocation3 + $0x14] sm:$0xf] %v1333
      %1398 = vst [vmem:[#allocation3 + $0x18] sm:$0xf] %v1334
      %1399 = vst [vmem:[#allocation3 + $0x1c] sm:$0xf] %v1335
      %1400 = vst [vmem:[#allocation3 + $0x20] sm:$0xf] %v1336
      %1401 = vst [vmem:[#allocation3 + $0x24] sm:$0xf] %v1337
      %1402 = vst [vmem:[#allocation3 + $0x28] sm:$0xf] %v1338
      %1403 = vst [vmem:[#allocation3 + $0x2c] sm:$0xf] %v1339
      %1404 = vst [vmem:[#allocation3 + $0x30] sm:$0xf] %v1340
      %1405 = vst [vmem:[#allocation3 + $0x34] sm:$0xf] %v1341
      %1406 = vst [vmem:[#allocation3 + $0x38] sm:$0xf] %v1342
      %1407 = vst [vmem:[#allocation3 + $0x3c] sm:$0xf] %v1343
      %1408 = vst [vmem:[#allocation3 + $0x40] sm:$0xf] %v1344
      %1409 = vst [vmem:[#allocation3 + $0x44] sm:$0xf] %v1345
      %1410 = vst [vmem:[#allocation3 + $0x48] sm:$0xf] %v1346
      %1411 = vst [vmem:[#allocation3 + $0x4c] sm:$0xf] %v1347
      %1412 = vst [vmem:[#allocation3 + $0x50] sm:$0xf] %v1348
      %1413 = vst [vmem:[#allocation3 + $0x54] sm:$0xf] %v1349
      %1414 = vst [vmem:[#allocation3 + $0x58] sm:$0xf] %v1350
      %1415 = vst [vmem:[#allocation3 + $0x5c] sm:$0xf] %v1351
      %1416 = vst [vmem:[#allocation3 + $0x60] sm:$0xf] %v1352
      %1417 = vst [vmem:[#allocation3 + $0x64] sm:$0xf] %v1353
      %1418 = vst [vmem:[#allocation3 + $0x68] sm:$0xf] %v1354
      %1419 = vst [vmem:[#allocation3 + $0x6c] sm:$0xf] %v1355
      %1420 = vst [vmem:[#allocation3 + $0x70] sm:$0xf] %v1356
      %1421 = vst [vmem:[#allocation3 + $0x74] sm:$0xf] %v1357
      %1422 = vst [vmem:[#allocation3 + $0x78] sm:$0xf] %v1358
      %1423 = vst [vmem:[#allocation3 + $0x7c] sm:$0xf] %v1359
      %1424 = vst [vmem:[#allocation3 + $0x80] sm:$0xf] %v1360
      %1425 = vst [vmem:[#allocation3 + $0x84] sm:$0xf] %v1361
      %1426 = vst [vmem:[#allocation3 + $0x88] sm:$0xf] %v1362
      %1427 = vst [vmem:[#allocation3 + $0x8c] sm:$0xf] %v1363
      %1428 = vst [vmem:[#allocation3 + $0x90] sm:$0xf] %v1364
      %1429 = vst [vmem:[#allocation3 + $0x94] sm:$0xf] %v1365
      %1430 = vst [vmem:[#allocation3 + $0x98] sm:$0xf] %v1366
      %1431 = vst [vmem:[#allocation3 + $0x9c] sm:$0xf] %v1367
      %1432 = vst [vmem:[#allocation3 + $0xa0] sm:$0xf] %v1368
      %1433 = vst [vmem:[#allocation3 + $0xa4] sm:$0xf] %v1369
      %1434 = vst [vmem:[#allocation3 + $0xa8] sm:$0xf] %v1370
      %1435 = vst [vmem:[#allocation3 + $0xac] sm:$0xf] %v1371
      %1436 = vst [vmem:[#allocation3 + $0xb0] sm:$0xf] %v1372
      %1437 = vst [vmem:[#allocation3 + $0xb4] sm:$0xf] %v1373
      %1438 = vst [vmem:[#allocation3 + $0xb8] sm:$0xf] %v1374
      %1439 = vst [vmem:[#allocation3 + $0xbc] sm:$0xf] %v1375
      %1440 = vst [vmem:[#allocation3 + $0xc0] sm:$0xf] %v1376
      %1441 = vst [vmem:[#allocation3 + $0xc4] sm:$0xf] %v1377
      %1442 = vst [vmem:[#allocation3 + $0xc8] sm:$0xf] %v1378
      %1443 = vst [vmem:[#allocation3 + $0xcc] sm:$0xf] %v1379
      %1444 = vst [vmem:[#allocation3 + $0xd0] sm:$0xf] %v1380
      %1445 = vst [vmem:[#allocation3 + $0xd4] sm:$0xf] %v1381
      %1446 = vst [vmem:[#allocation3 + $0xd8] sm:$0xf] %v1382
      %1447 = vst [vmem:[#allocation3 + $0xdc] sm:$0xf] %v1383
      %1448 = vst [vmem:[#allocation3 + $0xe0] sm:$0xf] %v1384
      %1449 = vst [vmem:[#allocation3 + $0xe4] sm:$0xf] %v1385
      %1450 = vst [vmem:[#allocation3 + $0xe8] sm:$0xf] %v1386
      %1451 = vst [vmem:[#allocation3 + $0xec] sm:$0xf] %v1387
      %1452 = vst [vmem:[#allocation3 + $0xf0] sm:$0xf] %v1388
      %1453 = vst [vmem:[#allocation3 + $0xf4] sm:$0xf] %v1389
      %1454 = vst [vmem:[#allocation3 + $0xf8] sm:$0xf] %v1390
      %1455 = vst [vmem:[#allocation3 + $0xfc] sm:$0xf] %v1391
    $region25: #{conv2d_bn_mm.1} parent=1 // pred_fallthru
      _
    // Predicated region
    $region26: #{conv2d_bn_mm.1} parent=1 // pred_check
      _
    $region27: #{conv2d_bn_mm.1} parent=1 // pred_check_branch
      %1457 = sbr.rel (0) target = $region29
    $region28: #{conv2d_bn_mm.1} parent=1 // pred_region
      %1459 = vsyncadd [#allocation4], 0
      %s1460 = sshll.u32 [#allocation3], 4
      %s1461 = int_to_ptr.vmem [resolvable:$true] %s1460
      %s1462 = sshll.u32 %s3, 4
      %s1463 = int_to_ptr.hbm [resolvable:$true] %s1462
      %1468 = dma.vmem_to_hbm [thread:$0]  %s1461, 4096, %s1463, [#allocation4], 64, 64, 4
    $region29: #{conv2d_bn_mm.1} parent=1 // pred_fallthru
      _
    // Predicated region
    $region30: #{conv2d_bn_mm.1} parent=1 // pred_check
      _
    $region31: #{conv2d_bn_mm.1} parent=1 // pred_check_branch
      %1470 = sbr.rel (0) target = $region33
    $region32: #{conv2d_bn_mm.1} parent=1 // pred_region
      %1472 = dma.done [#allocation4], 4096
    $region33: #{conv2d_bn_mm.1} parent=1 // pred_fallthru
      _
    %1473 = vsyncpa [#allocation4], 1

</llo_original>
